<compile_context>
chip_gen: v7x
topology: tpu7x:2x2x1
jax: 0.10.0
libtpu: 0.0.40
codegen_flags: <defaults>
</compile_context>

<pallas_src>
import functools

import jax
import jax.numpy as jnp
from jax.experimental import pallas as pl
from jax.experimental.pallas import tpu as pltpu

NEG_SLOPE = 0.01   # PyTorch LeakyReLU default
BN_EPS = 1e-5      # PyTorch BatchNorm default


def _round_up(x, m):
    return ((x + m - 1) // m) * m


# ---------------------------------------------------------------------------
# Pallas kernel 1: tiled  act((X @ W) * scale + shift)
#   grid = (M/tm, N/tn, K/tk); f32 accumulator in VMEM scratch; epilogue only
#   on the last K step.
# ---------------------------------------------------------------------------
def _fused_matmul_kernel(x_ref, w_ref, scale_ref, shift_ref, o_ref, acc_ref, *, act):
    @pl.when(pl.program_id(2) == 0)
    def _init():
        acc_ref[...] = jnp.zeros_like(acc_ref)

    acc_ref[...] += jnp.dot(x_ref[...], w_ref[...],
                            preferred_element_type=jnp.float32)

    @pl.when(pl.program_id(2) == pl.num_programs(2) - 1)
    def _finalize():
        y = acc_ref[...] * scale_ref[...] + shift_ref[...]
        if act == "leaky_relu":
            y = jnp.where(y >= 0, y, NEG_SLOPE * y)
        elif act == "sigmoid":
            y = jax.nn.sigmoid(y)
        o_ref[...] = y.astype(o_ref.dtype)


def fused_matmul(x, w, scale, shift, act):
    """out = act((x @ w) * scale + shift); scale/shift broadcast over rows.

    x/w are fed to the MXU in bf16; accumulate + epilogue in f32.
    Pads M to a multiple of 8, K/N to multiples of 128 where needed.
    """
    M, K = x.shape
    K2, N = w.shape
    assert K == K2

    # ----- tile sizes (respect the (8,128) block-shape rules) -----
    if M <= 256:
        Mp = _round_up(M, 8)
        tm = Mp
    else:
        tm = 256
        Mp = _round_up(M, tm)
    if N < 128:
        Np, tn = N, N                      # full-dim block (allowed)
    else:
        Np = _round_up(N, 128)
        tn = 128                           # lane-dense output tiles
    Kp = _round_up(K, 128)
    tk = 512 if Kp % 512 == 0 else (256 if Kp % 256 == 0 else 128)
    tk = min(tk, Kp)

    xp = jnp.pad(x, ((0, Mp - M), (0, Kp - K))).astype(jnp.bfloat16)
    wp = jnp.pad(w, ((0, Kp - K), (0, Np - N))).astype(jnp.bfloat16)
    sp = jnp.pad(jnp.asarray(scale, jnp.float32).reshape(1, N), ((0, 0), (0, Np - N)))
    bp = jnp.pad(jnp.asarray(shift, jnp.float32).reshape(1, N), ((0, 0), (0, Np - N)))

    grid = (Mp // tm, Np // tn, Kp // tk)
    cost = pl.CostEstimate(
        flops=2 * Mp * Np * Kp,
        transcendentals=(Mp * Np) if act == "sigmoid" else 0,
        bytes_accessed=Mp * Kp * 2 + Kp * Np * 2 + Mp * Np * 4 + 2 * Np * 4,
    )

    out = pl.pallas_call(
        functools.partial(_fused_matmul_kernel, act=act),
        out_shape=jax.ShapeDtypeStruct((Mp, Np), jnp.float32),
        grid=grid,
        in_specs=[
            pl.BlockSpec((tm, tk), lambda i, j, k: (i, k)),
            pl.BlockSpec((tk, tn), lambda i, j, k: (k, j)),
            pl.BlockSpec((1, tn), lambda i, j, k: (0, j)),
            pl.BlockSpec((1, tn), lambda i, j, k: (0, j)),
        ],
        out_specs=pl.BlockSpec((tm, tn), lambda i, j, k: (i, j)),
        scratch_shapes=[pltpu.VMEM((tm, tn), jnp.float32)],
        compiler_params=pltpu.CompilerParams(
            dimension_semantics=("parallel", "parallel", "arbitrary"),
            vmem_limit_bytes=32 * 1024 * 1024,
        ),
        cost_estimate=cost,
    )(xp, wp, sp, bp)

    if Mp != M or Np != N:
        out = out[:M, :N]
    return out


# ---------------------------------------------------------------------------
# Pallas kernel 2: fused FC head
#   fc1 (no bias) + BatchNorm1d + LeakyReLU  ->  fc2 (+bias) + sigmoid
#   fc1 output lives in VMEM scratch; fc2 is a lane reduction against a
#   pre-transposed (1, 512) weight; one pallas_call, one tiny store.
# ---------------------------------------------------------------------------
def _fc_head_kernel(x_ref, w1_ref, s1_ref, b1_ref, w2t_ref, b2_ref, o_ref, h_acc):
    k = pl.program_id(1)

    @pl.when(k == 0)
    def _init():
        h_acc[...] = jnp.zeros_like(h_acc)

    h_acc[...] += jnp.dot(x_ref[...], w1_ref[...],
                          preferred_element_type=jnp.float32)

    @pl.when(k == pl.num_programs(1) - 1)
    def _finalize():
        h = h_acc[...] * s1_ref[...] + b1_ref[...]
        h = jnp.where(h >= 0, h, NEG_SLOPE * h)
        logits = jnp.sum(h * w2t_ref[...], axis=1, keepdims=True) + b2_ref[...]
        o_ref[...] = jax.nn.sigmoid(logits).astype(o_ref.dtype)


def fc_head(flat, w1, scale1, shift1, w2t, b2):
    M, Kf = flat.shape
    Kf2, N1 = w1.shape
    assert Kf == Kf2

    if M <= 256:
        Mp = _round_up(M, 8)
        tm = Mp
    else:
        tm = 256
        Mp = _round_up(M, tm)
    Kp = _round_up(Kf, 128)
    tk = 512 if Kp % 512 == 0 else (256 if Kp % 256 == 0 else 128)
    tk = min(tk, Kp)

    xp = jnp.pad(flat, ((0, Mp - M), (0, Kp - Kf))).astype(jnp.bfloat16)
    w1p = jnp.pad(w1, ((0, Kp - Kf), (0, 0)))           # already bf16

    grid = (Mp // tm, Kp // tk)
    cost = pl.CostEstimate(
        flops=2 * Mp * N1 * Kp + 3 * Mp * N1,
        transcendentals=Mp,
        bytes_accessed=Mp * Kp * 2 + Kp * N1 * 2 + 3 * N1 * 4 + Mp * 4,
    )

    out = pl.pallas_call(
        _fc_head_kernel,
        out_shape=jax.ShapeDtypeStruct((Mp, 1), jnp.float32),
        grid=grid,
        in_specs=[
            pl.BlockSpec((tm, tk), lambda i, k: (i, k)),
            pl.BlockSpec((tk, N1), lambda i, k: (k, 0)),
            pl.BlockSpec((1, N1), lambda i, k: (0, 0)),
            pl.BlockSpec((1, N1), lambda i, k: (0, 0)),
            pl.BlockSpec((1, N1), lambda i, k: (0, 0)),
            pl.BlockSpec((1, 1), lambda i, k: (0, 0)),
        ],
        out_specs=pl.BlockSpec((tm, 1), lambda i, k: (i, 0)),
        scratch_shapes=[pltpu.VMEM((tm, N1), jnp.float32)],
        compiler_params=pltpu.CompilerParams(
            dimension_semantics=("parallel", "arbitrary"),
            vmem_limit_bytes=32 * 1024 * 1024,
        ),
        cost_estimate=cost,
    )(xp, w1p, scale1, shift1, w2t, b2)

    return out[:M]


# ---------------------------------------------------------------------------
# Conv (k=5, stride=2, pad=2) + BatchNorm + LeakyReLU via im2col + fused matmul
# ---------------------------------------------------------------------------
def _im2col(x_nhwc, k=5, stride=2, pad=2):
    N, H, W, C = x_nhwc.shape
    Ho = (H + 2 * pad - k) // stride + 1
    Wo = (W + 2 * pad - k) // stride + 1
    xp = jnp.pad(x_nhwc, ((0, 0), (pad, pad), (pad, pad), (0, 0)))
    cols = []
    for kh in range(k):
        for kw in range(k):
            cols.append(xp[:, kh:kh + stride * Ho:stride,
                           kw:kw + stride * Wo:stride, :])
    patches = jnp.stack(cols, axis=3)                 # (N, Ho, Wo, k*k, C)
    return patches.reshape(N * Ho * Wo, k * k * C), Ho, Wo


def conv_bn_lrelu(x_nhwc, layer):
    patches, Ho, Wo = _im2col(x_nhwc)
    out = fused_matmul(patches, layer["w2d"], layer["scale"], layer["shift"],
                       act="leaky_relu")
    N = x_nhwc.shape[0]
    Cout = layer["w2d"].shape[1]
    return out.reshape(N, Ho, Wo, Cout)


# ---------------------------------------------------------------------------
# Parameter init (PyTorch-layout, deterministic synthetic) and one-time
# preparation (weight reshapes, BN folding, fc1 row permutation, bf16 casts).
# ---------------------------------------------------------------------------
def _fold_bn(gamma, beta, mean, var):
    scale = gamma / jnp.sqrt(var + BN_EPS)
    shift = beta - mean * scale
    return scale, shift


def init_params(key, input_image_width, input_channels,
                output_channels=64, num_conv_layers=2):
    keys = iter(jax.random.split(key, 64))
    cin, cout, w = input_channels, output_channels, input_image_width
    convs = []
    for _ in range(num_conv_layers):
        convs.append(dict(
            w=0.05 * jax.random.normal(next(keys), (cout, cin, 5, 5), jnp.float32),
            gamma=1.0 + 0.1 * jax.random.normal(next(keys), (cout,), jnp.float32),
            beta=0.1 * jax.random.normal(next(keys), (cout,), jnp.float32),
            mean=0.1 * jax.random.normal(next(keys), (cout,), jnp.float32),
            var=jnp.abs(1.0 + 0.1 * jax.random.normal(next(keys), (cout,), jnp.float32)),
        ))
        cin, cout = cout, cout * 2
        w = (w - 5 + 2 * 2) // 2 + 1
    feat = w * w * cin
    return dict(
        convs=convs,
        fc1_w=0.02 * jax.random.normal(next(keys), (feat, 512), jnp.float32),
        fc1_gamma=1.0 + 0.1 * jax.random.normal(next(keys), (512,), jnp.float32),
        fc1_beta=0.1 * jax.random.normal(next(keys), (512,), jnp.float32),
        fc1_mean=0.1 * jax.random.normal(next(keys), (512,), jnp.float32),
        fc1_var=jnp.abs(1.0 + 0.1 * jax.random.normal(next(keys), (512,), jnp.float32)),
        fc2_w=0.05 * jax.random.normal(next(keys), (512, 1), jnp.float32),
        fc2_b=0.1 * jax.random.normal(next(keys), (1,), jnp.float32),
    )


def prepare_params(params, input_image_width):
    """One-time constant folding: keeps all per-forward ops on the hot path
    limited to im2col glue + the two Pallas kernels."""
    w = input_image_width
    prepared_convs = []
    for layer in params["convs"]:
        Cout, Cin, kh, kw = layer["w"].shape
        # (Cout, Cin, kh, kw) -> (kh, kw, Cin, Cout) -> (kh*kw*Cin, Cout),
        # matching the (kh, kw, c) ordering of the im2col patch vector.
        w2d = jnp.transpose(layer["w"], (2, 3, 1, 0)).reshape(kh * kw * Cin, Cout)
        scale, shift = _fold_bn(layer["gamma"], layer["beta"],
                                layer["mean"], layer["var"])
        prepared_convs.append(dict(
            w2d=w2d.astype(jnp.bfloat16),
            scale=scale.reshape(1, Cout).astype(jnp.float32),
            shift=shift.reshape(1, Cout).astype(jnp.float32),
        ))
        w = (w - 5 + 2 * 2) // 2 + 1

    # fc1: permute rows once so flattening NHWC directly matches PyTorch's
    # NCHW `.view(len, -1)` (C,H,W) ordering (no per-forward transpose).
    Cf = params["convs"][-1]["w"].shape[0]
    Hf = Wf = w
    idx_chw = jnp.arange(Cf * Hf * Wf).reshape(Cf, Hf, Wf)
    perm = jnp.transpose(idx_chw, (1, 2, 0)).reshape(-1)   # perm[hwc] = chw
    fc1_w_hwc = params["fc1_w"][perm, :]
    s1, b1 = _fold_bn(params["fc1_gamma"], params["fc1_beta"],
                      params["fc1_mean"], params["fc1_var"])
    return dict(
        convs=prepared_convs,
        fc1_w=fc1_w_hwc.astype(jnp.bfloat16),
        fc1_scale=s1.reshape(1, 512).astype(jnp.float32),
        fc1_shift=b1.reshape(1, 512).astype(jnp.float32),
        fc2_wt=params["fc2_w"].reshape(1, 512).astype(jnp.float32),
        fc2_b=params["fc2_b"].reshape(1, 1).astype(jnp.float32),
    )


# ---------------------------------------------------------------------------
# Full forward
# ---------------------------------------------------------------------------
def discriminator_forward(prepared, x_nchw):
    # PyTorch input is NCHW; convert once to NHWC (channels -> TPU lane dim).
    x = jnp.transpose(x_nchw, (0, 2, 3, 1))
    for layer in prepared["convs"]:
        x = conv_bn_lrelu(x, layer)
    N = x.shape[0]
    flat = x.reshape(N, -1)          # NHWC flatten; fc1 rows pre-permuted to match
    return fc_head(flat, prepared["fc1_w"], prepared["fc1_scale"],
                   prepared["fc1_shift"], prepared["fc2_wt"], prepared["fc2_b"])


if __name__ == "__main__":
    batch, channels, width = 2, 4, 16
    key = jax.random.PRNGKey(0)
    kparams, kx = jax.random.split(key)
    raw_params = init_params(kparams, input_image_width=width,
                             input_channels=channels)
    prepared = prepare_params(raw_params, input_image_width=width)
    x = jax.random.normal(kx, (batch, channels, width, width), jnp.float32)

    fwd = jax.jit(discriminator_forward)
    out = jax.block_until_ready(fwd(prepared, x))
    assert out.shape == (batch, 1)
    assert bool(jnp.all((out >= 0.0) & (out <= 1.0)))
    print("KERNEL_OK")
</pallas_src>

<mosaic_0001>
module attributes {stable_mosaic.version = 11 : i64} {
  func.func @_fused_matmul_kernel(%arg0: i32, %arg1: i32, %arg2: i32, %arg3: memref<128x128xbf16, #tpu.memory_space<vmem>>, %arg4: memref<128x64xbf16, #tpu.memory_space<vmem>>, %arg5: memref<1x64xf32, #tpu.memory_space<vmem>>, %arg6: memref<1x64xf32, #tpu.memory_space<vmem>>, %arg7: memref<128x64xf32, #tpu.memory_space<vmem>>, %arg8: memref<128x64xf32, #tpu.memory_space<vmem>>) attributes {dimension_semantics = [#tpu.dimension_semantics<parallel>, #tpu.dimension_semantics<parallel>, #tpu.dimension_semantics<arbitrary>], iteration_bounds = array<i64: 1, 1, 1>, scalar_prefetch = 0 : i64, scratch_operands = 1 : i64, tpu.core_type = #tpu.core_type<tc>, window_params = [{transform_indices = @transform_0, window_bounds = array<i64: 128, 128>}, {transform_indices = @transform_1, window_bounds = array<i64: 128, 64>}, {transform_indices = @transform_2, window_bounds = array<i64: 1, 64>}, {transform_indices = @transform_3, window_bounds = array<i64: 1, 64>}, {transform_indices = @transform_4, window_bounds = array<i64: 128, 64>}]} {
    %c0_i32 = arith.constant 0 : i32
    %0 = arith.cmpi eq, %arg2, %c0_i32 : i32
    %1 = arith.extui %0 : i1 to i32
    %c0_i32_0 = arith.constant 0 : i32
    %2 = arith.cmpi ne, %1, %c0_i32_0 : i32
    scf.if %2 {
      %cst_10 = arith.constant 0.000000e+00 : f32
      %12 = vector.broadcast %cst_10 : f32 to vector<128x64xf32>
      %c0_11 = arith.constant 0 : index
      %c0_12 = arith.constant 0 : index
      %13 = vector.load %arg8[%c0_11, %c0_12] : memref<128x64xf32, #tpu.memory_space<vmem>>, vector<128x64xf32>
      tpu.vector_store %arg8[%c0_11, %c0_12], %12 {strides = array<i32>} : memref<128x64xf32, #tpu.memory_space<vmem>>, vector<128x64xf32>,
    } else {
    }
    %c0 = arith.constant 0 : index
    %c0_1 = arith.constant 0 : index
    %3 = vector.load %arg8[%c0, %c0_1] : memref<128x64xf32, #tpu.memory_space<vmem>>, vector<128x64xf32>
    %c0_2 = arith.constant 0 : index
    %c0_3 = arith.constant 0 : index
    %4 = vector.load %arg3[%c0_2, %c0_3] : memref<128x128xbf16, #tpu.memory_space<vmem>>, vector<128x128xbf16>
    %c0_4 = arith.constant 0 : index
    %c0_5 = arith.constant 0 : index
    %5 = vector.load %arg4[%c0_4, %c0_5] : memref<128x64xbf16, #tpu.memory_space<vmem>>, vector<128x64xbf16>
    %cst = arith.constant dense<0.000000e+00> : vector<128x64xf32>
    %6 = tpu.matmul %4, %5, %cst {dimension_numbers = #tpu.dot_dimension_numbers<[1], [0], [0], [1], [0, 0, 1, 1], [], []>} : vector<128x128xbf16>, vector<128x64xbf16>, vector<128x64xf32> -> vector<128x64xf32>
    %7 = arith.addf %3, %6 : vector<128x64xf32>
    %c0_6 = arith.constant 0 : index
    %c0_7 = arith.constant 0 : index
    %8 = vector.load %arg8[%c0_6, %c0_7] : memref<128x64xf32, #tpu.memory_space<vmem>>, vector<128x64xf32>
    tpu.vector_store %arg8[%c0_6, %c0_7], %7 {strides = array<i32>} : memref<128x64xf32, #tpu.memory_space<vmem>>, vector<128x64xf32>,
    %c0_i32_8 = arith.constant 0 : i32
    %9 = arith.cmpi eq, %arg2, %c0_i32_8 : i32
    %10 = arith.extui %9 : i1 to i32
    %c0_i32_9 = arith.constant 0 : i32
    %11 = arith.cmpi ne, %10, %c0_i32_9 : i32
    scf.if %11 {
      %c0_10 = arith.constant 0 : index
      %c0_11 = arith.constant 0 : index
      %12 = vector.load %arg8[%c0_10, %c0_11] : memref<128x64xf32, #tpu.memory_space<vmem>>, vector<128x64xf32>
      %c0_12 = arith.constant 0 : index
      %c0_13 = arith.constant 0 : index
      %13 = vector.load %arg5[%c0_12, %c0_13] : memref<1x64xf32, #tpu.memory_space<vmem>>, vector<1x64xf32>
      %14 = vector.broadcast %13 : vector<1x64xf32> to vector<128x64xf32>
      %15 = arith.mulf %12, %14 : vector<128x64xf32>
      %c0_14 = arith.constant 0 : index
      %c0_15 = arith.constant 0 : index
      %16 = vector.load %arg6[%c0_14, %c0_15] : memref<1x64xf32, #tpu.memory_space<vmem>>, vector<1x64xf32>
      %17 = vector.broadcast %16 : vector<1x64xf32> to vector<128x64xf32>
      %18 = arith.addf %15, %17 : vector<128x64xf32>
      %cst_16 = arith.constant 0.000000e+00 : f32
      %19 = vector.broadcast %cst_16 : f32 to vector<128x64xf32>
      %20 = arith.cmpf oge, %18, %19 : vector<128x64xf32>
      %cst_17 = arith.constant 0.00999999977 : f32
      %21 = vector.broadcast %cst_17 : f32 to vector<128x64xf32>
      %22 = arith.mulf %21, %18 : vector<128x64xf32>
      %23 = arith.select %20, %18, %22 : vector<128x64xi1>, vector<128x64xf32>
      %c0_18 = arith.constant 0 : index
      %c0_19 = arith.constant 0 : index
      %24 = vector.load %arg7[%c0_18, %c0_19] : memref<128x64xf32, #tpu.memory_space<vmem>>, vector<128x64xf32>
      tpu.vector_store %arg7[%c0_18, %c0_19], %23 {strides = array<i32>} : memref<128x64xf32, #tpu.memory_space<vmem>>, vector<128x64xf32>,
    } else {
    }
    return
  }
  func.func @transform_0(%arg0: i32, %arg1: i32, %arg2: i32) -> (i32, i32) {
    %c0_i32 = arith.constant 0 : i32
    return %arg0, %arg2 : i32, i32
  }
  func.func @transform_1(%arg0: i32, %arg1: i32, %arg2: i32) -> (i32, i32) {
    %c0_i32 = arith.constant 0 : i32
    return %arg2, %arg1 : i32, i32
  }
  func.func @transform_2(%arg0: i32, %arg1: i32, %arg2: i32) -> (i32, i32) {
    %c0_i32 = arith.constant 0 : i32
    %c0_i32_0 = arith.constant 0 : i32
    return %c0_i32, %arg1 : i32, i32
  }
  func.func @transform_3(%arg0: i32, %arg1: i32, %arg2: i32) -> (i32, i32) {
    %c0_i32 = arith.constant 0 : i32
    %c0_i32_0 = arith.constant 0 : i32
    return %c0_i32, %arg1 : i32, i32
  }
  func.func @transform_4(%arg0: i32, %arg1: i32, %arg2: i32) -> (i32, i32) {
    %c0_i32 = arith.constant 0 : i32
    return %arg0, %arg1 : i32, i32
  }
}

module attributes {stable_mosaic.version = 11 : i64} {
  func.func @_fused_matmul_kernel(%arg0: i32, %arg1: i32, %arg2: i32, %arg3: memref<32x128xbf16, #tpu.memory_space<vmem>>, %arg4: memref<128x128xbf16, #tpu.memory_space<vmem>>, %arg5: memref<1x128xf32, #tpu.memory_space<vmem>>, %arg6: memref<1x128xf32, #tpu.memory_space<vmem>>, %arg7: memref<32x128xf32, #tpu.memory_space<vmem>>, %arg8: memref<32x128xf32, #tpu.memory_space<vmem>>) attributes {dimension_semantics = [#tpu.dimension_semantics<parallel>, #tpu.dimension_semantics<parallel>, #tpu.dimension_semantics<arbitrary>], iteration_bounds = array<i64: 1, 1, 13>, scalar_prefetch = 0 : i64, scratch_operands = 1 : i64, tpu.core_type = #tpu.core_type<tc>, window_params = [{transform_indices = @transform_0, window_bounds = array<i64: 32, 128>}, {transform_indices = @transform_1, window_bounds = array<i64: 128, 128>}, {transform_indices = @transform_2, window_bounds = array<i64: 1, 128>}, {transform_indices = @transform_3, window_bounds = array<i64: 1, 128>}, {transform_indices = @transform_4, window_bounds = array<i64: 32, 128>}]} {
    %c0_i32 = arith.constant 0 : i32
    %0 = arith.cmpi eq, %arg2, %c0_i32 : i32
    %1 = arith.extui %0 : i1 to i32
    %c0_i32_0 = arith.constant 0 : i32
    %2 = arith.cmpi ne, %1, %c0_i32_0 : i32
    scf.if %2 {
      %cst_9 = arith.constant 0.000000e+00 : f32
      %12 = vector.broadcast %cst_9 : f32 to vector<32x128xf32>
      %c0_10 = arith.constant 0 : index
      %c0_11 = arith.constant 0 : index
      %13 = vector.load %arg8[%c0_10, %c0_11] : memref<32x128xf32, #tpu.memory_space<vmem>>, vector<32x128xf32>
      tpu.vector_store %arg8[%c0_10, %c0_11], %12 {strides = array<i32>} : memref<32x128xf32, #tpu.memory_space<vmem>>, vector<32x128xf32>,
    } else {
    }
    %c0 = arith.constant 0 : index
    %c0_1 = arith.constant 0 : index
    %3 = vector.load %arg8[%c0, %c0_1] : memref<32x128xf32, #tpu.memory_space<vmem>>, vector<32x128xf32>
    %c0_2 = arith.constant 0 : index
    %c0_3 = arith.constant 0 : index
    %4 = vector.load %arg3[%c0_2, %c0_3] : memref<32x128xbf16, #tpu.memory_space<vmem>>, vector<32x128xbf16>
    %c0_4 = arith.constant 0 : index
    %c0_5 = arith.constant 0 : index
    %5 = vector.load %arg4[%c0_4, %c0_5] : memref<128x128xbf16, #tpu.memory_space<vmem>>, vector<128x128xbf16>
    %cst = arith.constant dense<0.000000e+00> : vector<32x128xf32>
    %6 = tpu.matmul %4, %5, %cst {dimension_numbers = #tpu.dot_dimension_numbers<[1], [0], [0], [1], [0, 0, 1, 1], [], []>} : vector<32x128xbf16>, vector<128x128xbf16>, vector<32x128xf32> -> vector<32x128xf32>
    %7 = arith.addf %3, %6 : vector<32x128xf32>
    %c0_6 = arith.constant 0 : index
    %c0_7 = arith.constant 0 : index
    %8 = vector.load %arg8[%c0_6, %c0_7] : memref<32x128xf32, #tpu.memory_space<vmem>>, vector<32x128xf32>
    tpu.vector_store %arg8[%c0_6, %c0_7], %7 {strides = array<i32>} : memref<32x128xf32, #tpu.memory_space<vmem>>, vector<32x128xf32>,
    %c12_i32 = arith.constant 12 : i32
    %9 = arith.cmpi eq, %arg2, %c12_i32 : i32
    %10 = arith.extui %9 : i1 to i32
    %c0_i32_8 = arith.constant 0 : i32
    %11 = arith.cmpi ne, %10, %c0_i32_8 : i32
    scf.if %11 {
      %c0_9 = arith.constant 0 : index
      %c0_10 = arith.constant 0 : index
      %12 = vector.load %arg8[%c0_9, %c0_10] : memref<32x128xf32, #tpu.memory_space<vmem>>, vector<32x128xf32>
      %c0_11 = arith.constant 0 : index
      %c0_12 = arith.constant 0 : index
      %13 = vector.load %arg5[%c0_11, %c0_12] : memref<1x128xf32, #tpu.memory_space<vmem>>, vector<1x128xf32>
      %14 = vector.broadcast %13 : vector<1x128xf32> to vector<32x128xf32>
      %15 = arith.mulf %12, %14 : vector<32x128xf32>
      %c0_13 = arith.constant 0 : index
      %c0_14 = arith.constant 0 : index
      %16 = vector.load %arg6[%c0_13, %c0_14] : memref<1x128xf32, #tpu.memory_space<vmem>>, vector<1x128xf32>
      %17 = vector.broadcast %16 : vector<1x128xf32> to vector<32x128xf32>
      %18 = arith.addf %15, %17 : vector<32x128xf32>
      %cst_15 = arith.constant 0.000000e+00 : f32
      %19 = vector.broadcast %cst_15 : f32 to vector<32x128xf32>
      %20 = arith.cmpf oge, %18, %19 : vector<32x128xf32>
      %cst_16 = arith.constant 0.00999999977 : f32
      %21 = vector.broadcast %cst_16 : f32 to vector<32x128xf32>
      %22 = arith.mulf %21, %18 : vector<32x128xf32>
      %23 = arith.select %20, %18, %22 : vector<32x128xi1>, vector<32x128xf32>
      %c0_17 = arith.constant 0 : index
      %c0_18 = arith.constant 0 : index
      %24 = vector.load %arg7[%c0_17, %c0_18] : memref<32x128xf32, #tpu.memory_space<vmem>>, vector<32x128xf32>
      tpu.vector_store %arg7[%c0_17, %c0_18], %23 {strides = array<i32>} : memref<32x128xf32, #tpu.memory_space<vmem>>, vector<32x128xf32>,
    } else {
    }
    return
  }
  func.func @transform_0(%arg0: i32, %arg1: i32, %arg2: i32) -> (i32, i32) {
    %c0_i32 = arith.constant 0 : i32
    return %arg0, %arg2 : i32, i32
  }
  func.func @transform_1(%arg0: i32, %arg1: i32, %arg2: i32) -> (i32, i32) {
    %c0_i32 = arith.constant 0 : i32
    return %arg2, %arg1 : i32, i32
  }
  func.func @transform_2(%arg0: i32, %arg1: i32, %arg2: i32) -> (i32, i32) {
    %c0_i32 = arith.constant 0 : i32
    %c0_i32_0 = arith.constant 0 : i32
    return %c0_i32, %arg1 : i32, i32
  }
  func.func @transform_3(%arg0: i32, %arg1: i32, %arg2: i32) -> (i32, i32) {
    %c0_i32 = arith.constant 0 : i32
    %c0_i32_0 = arith.constant 0 : i32
    return %c0_i32, %arg1 : i32, i32
  }
  func.func @transform_4(%arg0: i32, %arg1: i32, %arg2: i32) -> (i32, i32) {
    %c0_i32 = arith.constant 0 : i32
    return %arg0, %arg1 : i32, i32
  }
}

module attributes {stable_mosaic.version = 11 : i64} {
  func.func @_fc_head_kernel(%arg0: i32, %arg1: i32, %arg2: memref<8x512xbf16, #tpu.memory_space<vmem>>, %arg3: memref<512x512xbf16, #tpu.memory_space<vmem>>, %arg4: memref<1x512xf32, #tpu.memory_space<vmem>>, %arg5: memref<1x512xf32, #tpu.memory_space<vmem>>, %arg6: memref<1x512xf32, #tpu.memory_space<vmem>>, %arg7: memref<1x1xf32, #tpu.memory_space<vmem>>, %arg8: memref<8x1xf32, #tpu.memory_space<vmem>>, %arg9: memref<8x512xf32, #tpu.memory_space<vmem>>) attributes {dimension_semantics = [#tpu.dimension_semantics<parallel>, #tpu.dimension_semantics<arbitrary>], iteration_bounds = array<i64: 1, 4>, scalar_prefetch = 0 : i64, scratch_operands = 1 : i64, tpu.core_type = #tpu.core_type<tc>, window_params = [{transform_indices = @transform_0, window_bounds = array<i64: 8, 512>}, {transform_indices = @transform_1, window_bounds = array<i64: 512, 512>}, {pipeline_mode = #tpu.pipeline_mode<synchronous>, transform_indices = @transform_2, window_bounds = array<i64: 1, 512>}, {pipeline_mode = #tpu.pipeline_mode<synchronous>, transform_indices = @transform_3, window_bounds = array<i64: 1, 512>}, {pipeline_mode = #tpu.pipeline_mode<synchronous>, transform_indices = @transform_4, window_bounds = array<i64: 1, 512>}, {pipeline_mode = #tpu.pipeline_mode<synchronous>, transform_indices = @transform_5, window_bounds = array<i64: 1, 1>}, {transform_indices = @transform_6, window_bounds = array<i64: 8, 1>}]} {
    %c0_i32 = arith.constant 0 : i32
    %0 = arith.cmpi eq, %arg1, %c0_i32 : i32
    %1 = arith.extui %0 : i1 to i32
    %c0_i32_0 = arith.constant 0 : i32
    %2 = arith.cmpi ne, %1, %c0_i32_0 : i32
    scf.if %2 {
      %cst_9 = arith.constant 0.000000e+00 : f32
      %12 = vector.broadcast %cst_9 : f32 to vector<8x512xf32>
      %c0_10 = arith.constant 0 : index
      %c0_11 = arith.constant 0 : index
      %13 = vector.load %arg9[%c0_10, %c0_11] : memref<8x512xf32, #tpu.memory_space<vmem>>, vector<8x512xf32>
      tpu.vector_store %arg9[%c0_10, %c0_11], %12 {strides = array<i32>} : memref<8x512xf32, #tpu.memory_space<vmem>>, vector<8x512xf32>,
    } else {
    }
    %c0 = arith.constant 0 : index
    %c0_1 = arith.constant 0 : index
    %3 = vector.load %arg9[%c0, %c0_1] : memref<8x512xf32, #tpu.memory_space<vmem>>, vector<8x512xf32>
    %c0_2 = arith.constant 0 : index
    %c0_3 = arith.constant 0 : index
    %4 = vector.load %arg2[%c0_2, %c0_3] : memref<8x512xbf16, #tpu.memory_space<vmem>>, vector<8x512xbf16>
    %c0_4 = arith.constant 0 : index
    %c0_5 = arith.constant 0 : index
    %5 = vector.load %arg3[%c0_4, %c0_5] : memref<512x512xbf16, #tpu.memory_space<vmem>>, vector<512x512xbf16>
    %cst = arith.constant dense<0.000000e+00> : vector<8x512xf32>
    %6 = tpu.matmul %4, %5, %cst {dimension_numbers = #tpu.dot_dimension_numbers<[1], [0], [0], [1], [0, 0, 1, 1], [], []>} : vector<8x512xbf16>, vector<512x512xbf16>, vector<8x512xf32> -> vector<8x512xf32>
    %7 = arith.addf %3, %6 : vector<8x512xf32>
    %c0_6 = arith.constant 0 : index
    %c0_7 = arith.constant 0 : index
    %8 = vector.load %arg9[%c0_6, %c0_7] : memref<8x512xf32, #tpu.memory_space<vmem>>, vector<8x512xf32>
    tpu.vector_store %arg9[%c0_6, %c0_7], %7 {strides = array<i32>} : memref<8x512xf32, #tpu.memory_space<vmem>>, vector<8x512xf32>,
    %c3_i32 = arith.constant 3 : i32
    %9 = arith.cmpi eq, %arg1, %c3_i32 : i32
    %10 = arith.extui %9 : i1 to i32
    %c0_i32_8 = arith.constant 0 : i32
    %11 = arith.cmpi ne, %10, %c0_i32_8 : i32
    scf.if %11 {
      %c0_9 = arith.constant 0 : index
      %c0_10 = arith.constant 0 : index
      %12 = vector.load %arg9[%c0_9, %c0_10] : memref<8x512xf32, #tpu.memory_space<vmem>>, vector<8x512xf32>
      %c0_11 = arith.constant 0 : index
      %c0_12 = arith.constant 0 : index
      %13 = vector.load %arg4[%c0_11, %c0_12] : memref<1x512xf32, #tpu.memory_space<vmem>>, vector<1x512xf32>
      %14 = vector.broadcast %13 : vector<1x512xf32> to vector<8x512xf32>
      %15 = arith.mulf %12, %14 : vector<8x512xf32>
      %c0_13 = arith.constant 0 : index
      %c0_14 = arith.constant 0 : index
      %16 = vector.load %arg5[%c0_13, %c0_14] : memref<1x512xf32, #tpu.memory_space<vmem>>, vector<1x512xf32>
      %17 = vector.broadcast %16 : vector<1x512xf32> to vector<8x512xf32>
      %18 = arith.addf %15, %17 : vector<8x512xf32>
      %cst_15 = arith.constant 0.000000e+00 : f32
      %19 = vector.broadcast %cst_15 : f32 to vector<8x512xf32>
      %20 = arith.cmpf oge, %18, %19 : vector<8x512xf32>
      %cst_16 = arith.constant 0.00999999977 : f32
      %21 = vector.broadcast %cst_16 : f32 to vector<8x512xf32>
      %22 = arith.mulf %21, %18 : vector<8x512xf32>
      %23 = arith.select %20, %18, %22 : vector<8x512xi1>, vector<8x512xf32>
      %c0_17 = arith.constant 0 : index
      %c0_18 = arith.constant 0 : index
      %24 = vector.load %arg6[%c0_17, %c0_18] : memref<1x512xf32, #tpu.memory_space<vmem>>, vector<1x512xf32>
      %25 = vector.broadcast %24 : vector<1x512xf32> to vector<8x512xf32>
      %26 = arith.mulf %23, %25 : vector<8x512xf32>
      %cst_19 = arith.constant dense<0.000000e+00> : vector<8xf32>
      %27 = vector.multi_reduction <add>, %26, %cst_19 [1] : vector<8x512xf32> to vector<8xf32>
      %28 = vector.shape_cast %27 : vector<8xf32> to vector<8x1xf32>
      %c0_20 = arith.constant 0 : index
      %c0_21 = arith.constant 0 : index
      %29 = vector.load %arg7[%c0_20, %c0_21] : memref<1x1xf32, #tpu.memory_space<vmem>>, vector<1x1xf32>
      %30 = vector.broadcast %29 : vector<1x1xf32> to vector<8x1xf32>
      %31 = arith.addf %28, %30 : vector<8x1xf32>
      %32 = arith.negf %31 : vector<8x1xf32>
      %33 = math.exp %32 : vector<8x1xf32>
      %cst_22 = arith.constant 1.000000e+00 : f32
      %34 = vector.broadcast %cst_22 : f32 to vector<8x1xf32>
      %35 = arith.addf %34, %33 : vector<8x1xf32>
      %36 = arith.divf %34, %35 : vector<8x1xf32>
      %c0_23 = arith.constant 0 : index
      %c0_24 = arith.constant 0 : index
      %37 = vector.load %arg8[%c0_23, %c0_24] : memref<8x1xf32, #tpu.memory_space<vmem>>, vector<8x1xf32>
      tpu.vector_store %arg8[%c0_23, %c0_24], %36 {strides = array<i32>} : memref<8x1xf32, #tpu.memory_space<vmem>>, vector<8x1xf32>,
    } else {
    }
    return
  }
  func.func @transform_0(%arg0: i32, %arg1: i32) -> (i32, i32) {
    %c0_i32 = arith.constant 0 : i32
    return %arg0, %arg1 : i32, i32
  }
  func.func @transform_1(%arg0: i32, %arg1: i32) -> (i32, i32) {
    %c0_i32 = arith.constant 0 : i32
    %c0_i32_0 = arith.constant 0 : i32
    return %arg1, %c0_i32 : i32, i32
  }
  func.func @transform_2(%arg0: i32, %arg1: i32) -> (i32, i32) {
    %c0_i32 = arith.constant 0 : i32
    %c0_i32_0 = arith.constant 0 : i32
    %c0_i32_1 = arith.constant 0 : i32
    return %c0_i32, %c0_i32_0 : i32, i32
  }
  func.func @transform_3(%arg0: i32, %arg1: i32) -> (i32, i32) {
    %c0_i32 = arith.constant 0 : i32
    %c0_i32_0 = arith.constant 0 : i32
    %c0_i32_1 = arith.constant 0 : i32
    return %c0_i32, %c0_i32_0 : i32, i32
  }
  func.func @transform_4(%arg0: i32, %arg1: i32) -> (i32, i32) {
    %c0_i32 = arith.constant 0 : i32
    %c0_i32_0 = arith.constant 0 : i32
    %c0_i32_1 = arith.constant 0 : i32
    return %c0_i32, %c0_i32_0 : i32, i32
  }
  func.func @transform_5(%arg0: i32, %arg1: i32) -> (i32, i32) {
    %c0_i32 = arith.constant 0 : i32
    %c0_i32_0 = arith.constant 0 : i32
    %c0_i32_1 = arith.constant 0 : i32
    return %c0_i32, %c0_i32_0 : i32, i32
  }
  func.func @transform_6(%arg0: i32, %arg1: i32) -> (i32, i32) {
    %c0_i32 = arith.constant 0 : i32
    %c0_i32_0 = arith.constant 0 : i32
    return %arg0, %c0_i32 : i32, i32
  }
}

</mosaic_0001>

<llo_original>
// kernel: discriminator_forward.3
$region0: #{discriminator_forward.3}
  #allocation0 [shape = 'u32[]', space=smem, size = 0x4, offset = 0x4, fixed_abs, tag = 'smem constant byte address 0x4 - core index']
  #allocation1 [shape = 'u32[144,128]{1,0:T(1,128)}', space=vmem, size = 0x12000, scoped, tag = 'internal scratch']
  #allocation2 [shape = 'f32[128,64]{1,0:T(8,128)}', space=vmem, size = 0x10000, scoped, tag = 'scratch operand']
  %s0 = inlined_call_operand.vmem [shape: bf16[128,128], index: 0, kind: input, shape index: {}]
  %s1 = inlined_call_operand.vmem [shape: bf16[128,64], index: 1, kind: input, shape index: {}]
  %s2 = inlined_call_operand.vmem [shape: f32[1,64], index: 2, kind: input, shape index: {}]
  %s3 = inlined_call_operand.vmem [shape: f32[1,64], index: 3, kind: input, shape index: {}]
  %s4 = inlined_call_operand.vmem [shape: f32[128,64], index: 4, kind: output, shape index: {}]
  %s5 = sld [smem:[#allocation0]]
  $region34: #{discriminator_forward.3} parent=0
    _
  %s7 = ssub.s32 1, %s5
  %s8 = scalar_select 0, %s7, %s5
  // Predicated region
  $region2: #{discriminator_forward.3} parent=0 // pred_check
    _
  $region3: #{discriminator_forward.3} parent=0 // pred_check_branch
    %10 = sbr.rel (0) target = $region5
  $region4: #{discriminator_forward.3} parent=0 // pred_region
    _
  $region5: #{discriminator_forward.3} parent=0 // pred_fallthru
    _
  // Predicated region
  $region6: #{discriminator_forward.3} parent=0 // pred_check
    _
  $region7: #{discriminator_forward.3} parent=0 // pred_check_branch
    %12 = sbr.rel (0) target = $region9
  $region8: #{discriminator_forward.3} parent=0 // pred_region
    _
  $region9: #{discriminator_forward.3} parent=0 // pred_fallthru
    _
  // Predicated region
  $region10: #{discriminator_forward.3} parent=0 // pred_check
    _
  $region11: #{discriminator_forward.3} parent=0 // pred_check_branch
    %14 = sbr.rel (0) target = $region13
  $region12: #{discriminator_forward.3} parent=0 // pred_region
    _
  $region13: #{discriminator_forward.3} parent=0 // pred_fallthru
    _
  // Predicated region
  $region14: #{discriminator_forward.3} parent=0 // pred_check
    _
  $region15: #{discriminator_forward.3} parent=0 // pred_check_branch
    %16 = sbr.rel (0) target = $region17
  $region16: #{discriminator_forward.3} parent=0 // pred_region
    _
  $region17: #{discriminator_forward.3} parent=0 // pred_fallthru
    _
  %p18 = scmp.eq.s32.totalorder 0, 0
  // Predicated region
  $region18: #{discriminator_forward.3} parent=0 // pred_check
    %p19 = pneg %p18
  $region19: #{discriminator_forward.3} parent=0 // pred_check_branch
    %21 = sbr.rel (%p19) target = $region21
  $region20: #{discriminator_forward.3} parent=0 // pred_region
    %vm22 = vcmask 523264
    %23 = vst.msk [vmem:[#allocation2] sm:$0xff] %vm22, 0.0
    %24 = vst.msk [vmem:[#allocation2 + $0x8] sm:$0xff] %vm22, 0.0
    %25 = vst.msk [vmem:[#allocation2 + $0x10] sm:$0xff] %vm22, 0.0
    %26 = vst.msk [vmem:[#allocation2 + $0x18] sm:$0xff] %vm22, 0.0
    %27 = vst.msk [vmem:[#allocation2 + $0x20] sm:$0xff] %vm22, 0.0
    %28 = vst.msk [vmem:[#allocation2 + $0x28] sm:$0xff] %vm22, 0.0
    %29 = vst.msk [vmem:[#allocation2 + $0x30] sm:$0xff] %vm22, 0.0
    %30 = vst.msk [vmem:[#allocation2 + $0x38] sm:$0xff] %vm22, 0.0
    %31 = vst.msk [vmem:[#allocation2 + $0x40] sm:$0xff] %vm22, 0.0
    %32 = vst.msk [vmem:[#allocation2 + $0x48] sm:$0xff] %vm22, 0.0
    %33 = vst.msk [vmem:[#allocation2 + $0x50] sm:$0xff] %vm22, 0.0
    %34 = vst.msk [vmem:[#allocation2 + $0x58] sm:$0xff] %vm22, 0.0
    %35 = vst.msk [vmem:[#allocation2 + $0x60] sm:$0xff] %vm22, 0.0
    %36 = vst.msk [vmem:[#allocation2 + $0x68] sm:$0xff] %vm22, 0.0
    %37 = vst.msk [vmem:[#allocation2 + $0x70] sm:$0xff] %vm22, 0.0
    %38 = vst.msk [vmem:[#allocation2 + $0x78] sm:$0xff] %vm22, 0.0
  $region21: #{discriminator_forward.3} parent=0 // pred_fallthru
    _
  %v39 = vld [vmem:[#allocation2] sm:$0xff]
  %v40 = vld [vmem:[#allocation2 + $0x8] sm:$0xff]
  %v41 = vld [vmem:[#allocation2 + $0x10] sm:$0xff]
  %v42 = vld [vmem:[#allocation2 + $0x18] sm:$0xff]
  %v43 = vld [vmem:[#allocation2 + $0x20] sm:$0xff]
  %v44 = vld [vmem:[#allocation2 + $0x28] sm:$0xff]
  %v45 = vld [vmem:[#allocation2 + $0x30] sm:$0xff]
  %v46 = vld [vmem:[#allocation2 + $0x38] sm:$0xff]
  %v47 = vld [vmem:[#allocation2 + $0x40] sm:$0xff]
  %v48 = vld [vmem:[#allocation2 + $0x48] sm:$0xff]
  %v49 = vld [vmem:[#allocation2 + $0x50] sm:$0xff]
  %v50 = vld [vmem:[#allocation2 + $0x58] sm:$0xff]
  %v51 = vld [vmem:[#allocation2 + $0x60] sm:$0xff]
  %v52 = vld [vmem:[#allocation2 + $0x68] sm:$0xff]
  %v53 = vld [vmem:[#allocation2 + $0x70] sm:$0xff]
  %v54 = vld [vmem:[#allocation2 + $0x78] sm:$0xff]
  %v55 = vld [vmem:[%s0] sm:$0xf]
  %v56 = vld [vmem:[%s0 + $0x4] sm:$0xf]
  %v57 = vld [vmem:[%s0 + $0x8] sm:$0xf]
  %v58 = vld [vmem:[%s0 + $0xc] sm:$0xf]
  %v59 = vld [vmem:[%s0 + $0x10] sm:$0xf]
  %v60 = vld [vmem:[%s0 + $0x14] sm:$0xf]
  %v61 = vld [vmem:[%s0 + $0x18] sm:$0xf]
  %v62 = vld [vmem:[%s0 + $0x1c] sm:$0xf]
  %v63 = vld [vmem:[%s0 + $0x20] sm:$0xf]
  %v64 = vld [vmem:[%s0 + $0x24] sm:$0xf]
  %v65 = vld [vmem:[%s0 + $0x28] sm:$0xf]
  %v66 = vld [vmem:[%s0 + $0x2c] sm:$0xf]
  %v67 = vld [vmem:[%s0 + $0x30] sm:$0xf]
  %v68 = vld [vmem:[%s0 + $0x34] sm:$0xf]
  %v69 = vld [vmem:[%s0 + $0x38] sm:$0xf]
  %v70 = vld [vmem:[%s0 + $0x3c] sm:$0xf]
  %v71 = vld [vmem:[%s1] sm:$0xf]
  %v72 = vld [vmem:[%s1 + $0x4] sm:$0xf]
  %v73 = vld [vmem:[%s1 + $0x8] sm:$0xf]
  %v74 = vld [vmem:[%s1 + $0xc] sm:$0xf]
  %v75 = vld [vmem:[%s1 + $0x10] sm:$0xf]
  %v76 = vld [vmem:[%s1 + $0x14] sm:$0xf]
  %v77 = vld [vmem:[%s1 + $0x18] sm:$0xf]
  %v78 = vld [vmem:[%s1 + $0x1c] sm:$0xf]
  %v79 = vld [vmem:[%s1 + $0x20] sm:$0xf]
  %v80 = vld [vmem:[%s1 + $0x24] sm:$0xf]
  %v81 = vld [vmem:[%s1 + $0x28] sm:$0xf]
  %v82 = vld [vmem:[%s1 + $0x2c] sm:$0xf]
  %v83 = vld [vmem:[%s1 + $0x30] sm:$0xf]
  %v84 = vld [vmem:[%s1 + $0x34] sm:$0xf]
  %v85 = vld [vmem:[%s1 + $0x38] sm:$0xf]
  %v86 = vld [vmem:[%s1 + $0x3c] sm:$0xf]
  %v103 = vunpack.c.l.b16 %v55
  %v104 = vunpack.c.l.b16 %v56
  %v105 = vunpack.c.l.b16 %v57
  %v106 = vunpack.c.l.b16 %v58
  %v107 = vunpack.c.l.b16 %v59
  %v108 = vunpack.c.l.b16 %v60
  %v109 = vunpack.c.l.b16 %v61
  %v110 = vunpack.c.l.b16 %v62
  %v111 = vunpack.c.l.b16 %v63
  %v112 = vunpack.c.l.b16 %v64
  %v113 = vunpack.c.l.b16 %v65
  %v114 = vunpack.c.l.b16 %v66
  %v115 = vunpack.c.l.b16 %v67
  %v116 = vunpack.c.l.b16 %v68
  %v117 = vunpack.c.l.b16 %v69
  %v118 = vunpack.c.l.b16 %v70
  %v119 = vpack.c.b16 %v104, %v103
  %v120 = vpack.c.b16 %v106, %v105
  %v121 = vpack.c.b16 %v108, %v107
  %v122 = vpack.c.b16 %v110, %v109
  %v123 = vpack.c.b16 %v112, %v111
  %v124 = vpack.c.b16 %v114, %v113
  %v125 = vpack.c.b16 %v116, %v115
  %v126 = vpack.c.b16 %v118, %v117
  %v151 = vunpack.c.l.b16 %v71
  %v152 = vunpack.c.l.b16 %v72
  %v153 = vunpack.c.l.b16 %v73
  %v154 = vunpack.c.l.b16 %v74
  %v155 = vunpack.c.l.b16 %v75
  %v156 = vunpack.c.l.b16 %v76
  %v157 = vunpack.c.l.b16 %v77
  %v158 = vunpack.c.l.b16 %v78
  %v159 = vunpack.c.l.b16 %v79
  %v160 = vunpack.c.l.b16 %v80
  %v161 = vunpack.c.l.b16 %v81
  %v162 = vunpack.c.l.b16 %v82
  %v163 = vunpack.c.l.b16 %v83
  %v164 = vunpack.c.l.b16 %v84
  %v165 = vunpack.c.l.b16 %v85
  %v166 = vunpack.c.l.b16 %v86
  %v167 = vpack.c.b16 %v152, %v151
  %v168 = vpack.c.b16 %v154, %v153
  %v169 = vpack.c.b16 %v156, %v155
  %v170 = vpack.c.b16 %v158, %v157
  %v171 = vpack.c.b16 %v160, %v159
  %v172 = vpack.c.b16 %v162, %v161
  %v173 = vpack.c.b16 %v164, %v163
  %v174 = vpack.c.b16 %v166, %v165
  %183 = vmatprep.subr.bf16.mxu0 0
  %184 = vmatpush1.bf16.msra.mxu0 %v167
  %185 = vmatprep.subr.bf16.mxu0 0
  %186 = vmatpush1.bf16.msra.mxu0 %v168
  %187 = vmatprep.subr.bf16.mxu0 0
  %188 = vmatpush1.bf16.msra.mxu0 %v169
  %189 = vmatprep.subr.bf16.mxu0 0
  %190 = vmatpush1.bf16.msra.mxu0 %v170
  %191 = vmatprep.subr.bf16.mxu0 0
  %192 = vmatpush1.bf16.msra.mxu0 %v171
  %193 = vmatprep.subr.bf16.mxu0 0
  %194 = vmatpush1.bf16.msra.mxu0 %v172
  %195 = vmatprep.subr.bf16.mxu0 0
  %196 = vmatpush1.bf16.msra.mxu0 %v173
  %197 = vmatprep.subr.bf16.mxu0 0
  %198 = vmatpush1.bf16.msra.mxu0 %v174
  %199 = vmatprep.subr.bf16.mxu0 0
  %200 = vmatpush1.bf16.msra.mxu0 0
  %201 = vmatprep.subr.bf16.mxu0 0
  %202 = vmatpush1.bf16.msra.mxu0 0
  %203 = vmatprep.subr.bf16.mxu0 0
  %204 = vmatpush1.bf16.msra.mxu0 0
  %205 = vmatprep.subr.bf16.mxu0 0
  %206 = vmatpush1.bf16.msra.mxu0 0
  %207 = vmatprep.subr.bf16.mxu0 0
  %208 = vmatpush1.bf16.msra.mxu0 0
  %209 = vmatprep.subr.bf16.mxu0 0
  %210 = vmatpush1.bf16.msra.mxu0 0
  %211 = vmatprep.subr.bf16.mxu0 0
  %212 = vmatpush1.bf16.msra.mxu0 0
  %213 = vmatprep.subr.bf16.mxu0 0
  %214 = vmatpush1.bf16.msra.mxu0 0
  %215 = vmatprep.mubr.bf16.mxu0 0
  %216 = vmatmul.mubr.bf16.gmra.mrb[0].mxu0 %v119
  %v217 = vpop.f32.mrb[0].mxu0
  %v218 = vadd.f32 0.0, %v217
  %v219 = vpop.f32.mrb[0].mxu0
  %v220 = vpop.f32.mrb[0].mxu0
  %v221 = vadd.f32 0.0, %v220
  %v222 = vpop.f32.mrb[0].mxu0
  %223 = vmatprep.mubr.bf16.mxu0 0
  %224 = vmatmul.mubr.bf16.gmra.mrb[0].mxu0 %v120
  %v225 = vpop.f32.mrb[0].mxu0
  %v226 = vadd.f32 0.0, %v225
  %v227 = vpop.f32.mrb[0].mxu0
  %v228 = vpop.f32.mrb[0].mxu0
  %v229 = vadd.f32 0.0, %v228
  %v230 = vpop.f32.mrb[0].mxu0
  %231 = vmatprep.mubr.bf16.mxu0 0
  %232 = vmatmul.mubr.bf16.gmra.mrb[0].mxu0 %v121
  %v233 = vpop.f32.mrb[0].mxu0
  %v234 = vadd.f32 0.0, %v233
  %v235 = vpop.f32.mrb[0].mxu0
  %v236 = vpop.f32.mrb[0].mxu0
  %v237 = vadd.f32 0.0, %v236
  %v238 = vpop.f32.mrb[0].mxu0
  %239 = vmatprep.mubr.bf16.mxu0 0
  %240 = vmatmul.mubr.bf16.gmra.mrb[0].mxu0 %v122
  %v241 = vpop.f32.mrb[0].mxu0
  %v242 = vadd.f32 0.0, %v241
  %v243 = vpop.f32.mrb[0].mxu0
  %v244 = vpop.f32.mrb[0].mxu0
  %v245 = vadd.f32 0.0, %v244
  %v246 = vpop.f32.mrb[0].mxu0
  %247 = vmatprep.mubr.bf16.mxu0 0
  %248 = vmatmul.mubr.bf16.gmra.mrb[0].mxu0 %v123
  %v249 = vpop.f32.mrb[0].mxu0
  %v250 = vadd.f32 0.0, %v249
  %v251 = vpop.f32.mrb[0].mxu0
  %v252 = vpop.f32.mrb[0].mxu0
  %v253 = vadd.f32 0.0, %v252
  %v254 = vpop.f32.mrb[0].mxu0
  %255 = vmatprep.mubr.bf16.mxu0 0
  %256 = vmatmul.mubr.bf16.gmra.mrb[0].mxu0 %v124
  %v257 = vpop.f32.mrb[0].mxu0
  %v258 = vadd.f32 0.0, %v257
  %v259 = vpop.f32.mrb[0].mxu0
  %v260 = vpop.f32.mrb[0].mxu0
  %v261 = vadd.f32 0.0, %v260
  %v262 = vpop.f32.mrb[0].mxu0
  %263 = vmatprep.mubr.bf16.mxu0 0
  %264 = vmatmul.mubr.bf16.gmra.mrb[0].mxu0 %v125
  %v265 = vpop.f32.mrb[0].mxu0
  %v266 = vadd.f32 0.0, %v265
  %v267 = vpop.f32.mrb[0].mxu0
  %v268 = vpop.f32.mrb[0].mxu0
  %v269 = vadd.f32 0.0, %v268
  %v270 = vpop.f32.mrb[0].mxu0
  %271 = vmatprep.mubr.bf16.mxu0 0
  %272 = vmatmul.mubr.bf16.gmra.mrb[0].mxu0 %v126
  %v273 = vpop.f32.mrb[0].mxu0
  %v274 = vadd.f32 0.0, %v273
  %v275 = vpop.f32.mrb[0].mxu0
  %v276 = vpop.f32.mrb[0].mxu0
  %v277 = vadd.f32 0.0, %v276
  %v278 = vpop.f32.mrb[0].mxu0
  %279 = vdwg.mxu0
  %v280 = vadd.f32 %v39, %v218
  %v281 = vadd.f32 %v40, %v221
  %v282 = vadd.f32 %v41, %v226
  %v283 = vadd.f32 %v42, %v229
  %v284 = vadd.f32 %v43, %v234
  %v285 = vadd.f32 %v44, %v237
  %v286 = vadd.f32 %v45, %v242
  %v287 = vadd.f32 %v46, %v245
  %v288 = vadd.f32 %v47, %v250
  %v289 = vadd.f32 %v48, %v253
  %v290 = vadd.f32 %v49, %v258
  %v291 = vadd.f32 %v50, %v261
  %v292 = vadd.f32 %v51, %v266
  %v293 = vadd.f32 %v52, %v269
  %v294 = vadd.f32 %v53, %v274
  %v295 = vadd.f32 %v54, %v277
  %vm296 = vcmask 523264
  %297 = vst.msk [vmem:[#allocation2] sm:$0xff] %vm296, %v280
  %298 = vst.msk [vmem:[#allocation2 + $0x8] sm:$0xff] %vm296, %v281
  %299 = vst.msk [vmem:[#allocation2 + $0x10] sm:$0xff] %vm296, %v282
  %300 = vst.msk [vmem:[#allocation2 + $0x18] sm:$0xff] %vm296, %v283
  %301 = vst.msk [vmem:[#allocation2 + $0x20] sm:$0xff] %vm296, %v284
  %302 = vst.msk [vmem:[#allocation2 + $0x28] sm:$0xff] %vm296, %v285
  %303 = vst.msk [vmem:[#allocation2 + $0x30] sm:$0xff] %vm296, %v286
  %304 = vst.msk [vmem:[#allocation2 + $0x38] sm:$0xff] %vm296, %v287
  %305 = vst.msk [vmem:[#allocation2 + $0x40] sm:$0xff] %vm296, %v288
  %306 = vst.msk [vmem:[#allocation2 + $0x48] sm:$0xff] %vm296, %v289
  %307 = vst.msk [vmem:[#allocation2 + $0x50] sm:$0xff] %vm296, %v290
  %308 = vst.msk [vmem:[#allocation2 + $0x58] sm:$0xff] %vm296, %v291
  %309 = vst.msk [vmem:[#allocation2 + $0x60] sm:$0xff] %vm296, %v292
  %310 = vst.msk [vmem:[#allocation2 + $0x68] sm:$0xff] %vm296, %v293
  %311 = vst.msk [vmem:[#allocation2 + $0x70] sm:$0xff] %vm296, %v294
  %312 = vst.msk [vmem:[#allocation2 + $0x78] sm:$0xff] %vm296, %v295
  // Predicated region
  $region22: #{discriminator_forward.3} parent=0 // pred_check
    %p313 = pneg %p18
  $region23: #{discriminator_forward.3} parent=0 // pred_check_branch
    %315 = sbr.rel (%p313) target = $region25
  $region24: #{discriminator_forward.3} parent=0 // pred_region
    %v316 = vld [vmem:[#allocation2] sm:$0xff]
    %v317 = vld [vmem:[#allocation2 + $0x8] sm:$0xff]
    %v318 = vld [vmem:[#allocation2 + $0x10] sm:$0xff]
    %v319 = vld [vmem:[#allocation2 + $0x18] sm:$0xff]
    %v320 = vld [vmem:[#allocation2 + $0x20] sm:$0xff]
    %v321 = vld [vmem:[#allocation2 + $0x28] sm:$0xff]
    %v322 = vld [vmem:[#allocation2 + $0x30] sm:$0xff]
    %v323 = vld [vmem:[#allocation2 + $0x38] sm:$0xff]
    %v324 = vld [vmem:[#allocation2 + $0x40] sm:$0xff]
    %v325 = vld [vmem:[#allocation2 + $0x48] sm:$0xff]
    %v326 = vld [vmem:[#allocation2 + $0x50] sm:$0xff]
    %v327 = vld [vmem:[#allocation2 + $0x58] sm:$0xff]
    %v328 = vld [vmem:[#allocation2 + $0x60] sm:$0xff]
    %v329 = vld [vmem:[#allocation2 + $0x68] sm:$0xff]
    %v330 = vld [vmem:[#allocation2 + $0x70] sm:$0xff]
    %v331 = vld [vmem:[#allocation2 + $0x78] sm:$0xff]
    %v332 = vld [vmem:[%s2] sm:$0x1]
    %v334 = vlaneseq
    %v335 = vshrl.u32 %v334, 7
    %v336 = vsub.s32 0, %v335
    %v337 = vrot.slane %v332, %v336
    %v339 = vmul.f32 %v316, %v337
    %v340 = vmul.f32 %v317, %v337
    %v341 = vmul.f32 %v318, %v337
    %v342 = vmul.f32 %v319, %v337
    %v343 = vmul.f32 %v320, %v337
    %v344 = vmul.f32 %v321, %v337
    %v345 = vmul.f32 %v322, %v337
    %v346 = vmul.f32 %v323, %v337
    %v347 = vmul.f32 %v324, %v337
    %v348 = vmul.f32 %v325, %v337
    %v349 = vmul.f32 %v326, %v337
    %v350 = vmul.f32 %v327, %v337
    %v351 = vmul.f32 %v328, %v337
    %v352 = vmul.f32 %v329, %v337
    %v353 = vmul.f32 %v330, %v337
    %v354 = vmul.f32 %v331, %v337
    %v355 = vld [vmem:[%s3] sm:$0x1]
    %v357 = vlaneseq
    %v358 = vshrl.u32 %v357, 7
    %v359 = vsub.s32 0, %v358
    %v360 = vrot.slane %v355, %v359
    %v362 = vadd.f32 %v339, %v360
    %v363 = vadd.f32 %v340, %v360
    %v364 = vadd.f32 %v341, %v360
    %v365 = vadd.f32 %v342, %v360
    %v366 = vadd.f32 %v343, %v360
    %v367 = vadd.f32 %v344, %v360
    %v368 = vadd.f32 %v345, %v360
    %v369 = vadd.f32 %v346, %v360
    %v370 = vadd.f32 %v347, %v360
    %v371 = vadd.f32 %v348, %v360
    %v372 = vadd.f32 %v349, %v360
    %v373 = vadd.f32 %v350, %v360
    %v374 = vadd.f32 %v351, %v360
    %v375 = vadd.f32 %v352, %v360
    %v376 = vadd.f32 %v353, %v360
    %v377 = vadd.f32 %v354, %v360
    %vm378 = vcmp.ge.f32.partialorder %v362, 0.0
    %vm379 = vcmp.ge.f32.partialorder %v363, 0.0
    %vm380 = vcmp.ge.f32.partialorder %v364, 0.0
    %vm381 = vcmp.ge.f32.partialorder %v365, 0.0
    %vm382 = vcmp.ge.f32.partialorder %v366, 0.0
    %vm383 = vcmp.ge.f32.partialorder %v367, 0.0
    %vm384 = vcmp.ge.f32.partialorder %v368, 0.0
    %vm385 = vcmp.ge.f32.partialorder %v369, 0.0
    %vm386 = vcmp.ge.f32.partialorder %v370, 0.0
    %vm387 = vcmp.ge.f32.partialorder %v371, 0.0
    %vm388 = vcmp.ge.f32.partialorder %v372, 0.0
    %vm389 = vcmp.ge.f32.partialorder %v373, 0.0
    %vm390 = vcmp.ge.f32.partialorder %v374, 0.0
    %vm391 = vcmp.ge.f32.partialorder %v375, 0.0
    %vm392 = vcmp.ge.f32.partialorder %v376, 0.0
    %vm393 = vcmp.ge.f32.partialorder %v377, 0.0
    %v394 = vmul.f32 %v362, 0.01
    %v395 = vmul.f32 %v363, 0.01
    %v396 = vmul.f32 %v364, 0.01
    %v397 = vmul.f32 %v365, 0.01
    %v398 = vmul.f32 %v366, 0.01
    %v399 = vmul.f32 %v367, 0.01
    %v400 = vmul.f32 %v368, 0.01
    %v401 = vmul.f32 %v369, 0.01
    %v402 = vmul.f32 %v370, 0.01
    %v403 = vmul.f32 %v371, 0.01
    %v404 = vmul.f32 %v372, 0.01
    %v405 = vmul.f32 %v373, 0.01
    %v406 = vmul.f32 %v374, 0.01
    %v407 = vmul.f32 %v375, 0.01
    %v408 = vmul.f32 %v376, 0.01
    %v409 = vmul.f32 %v377, 0.01
    %v410 = vsel %vm378, %v362, %v394
    %v411 = vsel %vm379, %v363, %v395
    %v412 = vsel %vm380, %v364, %v396
    %v413 = vsel %vm381, %v365, %v397
    %v414 = vsel %vm382, %v366, %v398
    %v415 = vsel %vm383, %v367, %v399
    %v416 = vsel %vm384, %v368, %v400
    %v417 = vsel %vm385, %v369, %v401
    %v418 = vsel %vm386, %v370, %v402
    %v419 = vsel %vm387, %v371, %v403
    %v420 = vsel %vm388, %v372, %v404
    %v421 = vsel %vm389, %v373, %v405
    %v422 = vsel %vm390, %v374, %v406
    %v423 = vsel %vm391, %v375, %v407
    %v424 = vsel %vm392, %v376, %v408
    %v425 = vsel %vm393, %v377, %v409
    %426 = vst.msk [vmem:[%s4] sm:$0xff] %vm296, %v410
    %427 = vst.msk [vmem:[%s4 + $0x8] sm:$0xff] %vm296, %v411
    %428 = vst.msk [vmem:[%s4 + $0x10] sm:$0xff] %vm296, %v412
    %429 = vst.msk [vmem:[%s4 + $0x18] sm:$0xff] %vm296, %v413
    %430 = vst.msk [vmem:[%s4 + $0x20] sm:$0xff] %vm296, %v414
    %431 = vst.msk [vmem:[%s4 + $0x28] sm:$0xff] %vm296, %v415
    %432 = vst.msk [vmem:[%s4 + $0x30] sm:$0xff] %vm296, %v416
    %433 = vst.msk [vmem:[%s4 + $0x38] sm:$0xff] %vm296, %v417
    %434 = vst.msk [vmem:[%s4 + $0x40] sm:$0xff] %vm296, %v418
    %435 = vst.msk [vmem:[%s4 + $0x48] sm:$0xff] %vm296, %v419
    %436 = vst.msk [vmem:[%s4 + $0x50] sm:$0xff] %vm296, %v420
    %437 = vst.msk [vmem:[%s4 + $0x58] sm:$0xff] %vm296, %v421
    %438 = vst.msk [vmem:[%s4 + $0x60] sm:$0xff] %vm296, %v422
    %439 = vst.msk [vmem:[%s4 + $0x68] sm:$0xff] %vm296, %v423
    %440 = vst.msk [vmem:[%s4 + $0x70] sm:$0xff] %vm296, %v424
    %441 = vst.msk [vmem:[%s4 + $0x78] sm:$0xff] %vm296, %v425
  $region25: #{discriminator_forward.3} parent=0 // pred_fallthru
    _
  // Predicated region
  $region26: #{discriminator_forward.3} parent=0 // pred_check
    _
  $region27: #{discriminator_forward.3} parent=0 // pred_check_branch
    %443 = sbr.rel (0) target = $region29
  $region28: #{discriminator_forward.3} parent=0 // pred_region
    _
  $region29: #{discriminator_forward.3} parent=0 // pred_fallthru
    _
  // Predicated region
  $region30: #{discriminator_forward.3} parent=0 // pred_check
    _
  $region31: #{discriminator_forward.3} parent=0 // pred_check_branch
    %445 = sbr.rel (0) target = $region33
  $region32: #{discriminator_forward.3} parent=0 // pred_region
    _
  $region33: #{discriminator_forward.3} parent=0 // pred_fallthru
    _

// kernel: discriminator_forward.4
$region0: #{discriminator_forward.4}
  #allocation0 [shape = 'u32[]', space=smem, size = 0x4, offset = 0x4, fixed_abs, tag = 'smem constant byte address 0x4 - core index']
  #allocation1 [shape = 'u32[144,128]{1,0:T(1,128)}', space=vmem, size = 0x12000, scoped, tag = 'internal scratch']
  #allocation2 [shape = 'f32[32,128]{1,0:T(8,128)}', space=vmem, size = 0x4000, scoped, tag = 'scratch operand']
  %s0 = inlined_call_operand.vmem [shape: bf16[32,1664], index: 0, kind: input, shape index: {}]
  %s1 = inlined_call_operand.vmem [shape: bf16[1664,128], index: 1, kind: input, shape index: {}]
  %s2 = inlined_call_operand.vmem [shape: f32[1,128], index: 2, kind: input, shape index: {}]
  %s3 = inlined_call_operand.vmem [shape: f32[1,128], index: 3, kind: input, shape index: {}]
  %s4 = inlined_call_operand.vmem [shape: f32[32,128], index: 4, kind: output, shape index: {}]
  %s5 = sld [smem:[#allocation0]]
  $region98: #{discriminator_forward.4} parent=0
    _
  %s7 = ssub.s32 1, %s5
  %s8 = scalar_select 0, %s7, %s5
  $region1: #{discriminator_forward.4} parent=0
    #allocation3 [shape = 'u8[16384]{0}', space=vmem, size = 0x4000, scoped, tag = 'input window, operand 0']
    loop: start=0, step=1, limit=15
    $region2: #{discriminator_forward.4} parent=1 // loop_pre_header
      _
    $region3: #{discriminator_forward.4} parent=1 // loop_header
      %s10 = sphi 0, %s14
      %p11 = scmp.ge.s32.totalorder %s10, 15
      %s17 = sphi 0, %s36
      %s18 = sphi 0, %s32
      %s19 = sphi 0, %s28
      %s20 = sphi 0, %s17
      %s21 = sphi 0, %s18
      %s22 = sphi 0, %s19
      %s23 = sphi 0, %s20
      %s24 = sphi 0, %s21
      %s25 = sphi 0, %s22
      %s41 = sphi 0, %s43
      %s44 = sphi 0, %s41
      %s45 = sphi 0, %s44
      %s61 = sphi 0, %s45
      %s69 = sphi 0, %s71
      %s72 = sphi 0, %s69
      %s73 = sphi 0, %s72
      %s89 = sphi 0, %s73
      %s95 = sphi 0, %s97
      %s98 = sphi 0, %s95
      %s99 = sphi 0, %s98
      %s115 = sphi 0, %s99
      %s121 = sphi 0, %s123
      %s124 = sphi 0, %s121
      %s125 = sphi 0, %s124
      %s141 = sphi 0, %s125
      %s149 = sphi 0, %s151
      %s152 = sphi 0, %s149
      %s153 = sphi 0, %s152
      %s169 = sphi 0, %s153
    $region4: #{discriminator_forward.4} parent=1 // loop_header_branch
      %13 = sbr.rel (%p11) target = $region8
    $region5: #{discriminator_forward.4} parent=1 // loop_body
      %s15 = ssub.s32 %s10, 1
      %s16 = ssub.s32 %s10, 2
      %s26 = sadd.s32 1, %s19
      %p27 = scmp.ge.s32.totalorder %s26, 13
      %s28 = scalar_select %p27, 0, %s26
      %s29 = sadd.s32 1, %s18
      %s30 = scalar_select %p27, %s29, %s18
      %p31 = scmp.ge.s32.totalorder %s30, 1
      %s32 = scalar_select %p31, 0, %s30
      %s33 = sadd.s32 1, %s17
      %s34 = scalar_select %p31, %s33, %s17
      %p35 = scmp.ge.s32.totalorder %s34, 1
      %s36 = scalar_select %p35, 0, %s34
      %s37 = ssub.s32 %s17, %s36
      %s38 = ssub.s32 %s19, %s28
      %s39 = sor.u32 %s37, %s38
      %p40 = scmp.eq.s32.totalorder %s39, 0
      %s42 = sadd.s32 %s41, 1
      %s43 = scalar_select %p40, %s41, %s42
      %p46 = pneg %p40
      %p47 = scmp.eq.s32.totalorder %s10, 12
      %p48 = por %p46, %p47
      %p49 = scmp.ne.s32.totalorder %s41, %s44
      %p50 = scmp.eq.s32.totalorder %s10, 0
      %p51 = por %p49, %p50
      %p52 = scmp.ne.s32.totalorder %s41, %s44
      %p53 = scmp.eq.s32.totalorder %s15, 12
      %p54 = por %p52, %p53
      %p55 = scmp.ne.s32.totalorder %s44, %s45
      %p56 = scmp.eq.s32.totalorder %s15, 0
      %p57 = por %p55, %p56
      %p58 = scmp.ne.s32.totalorder %s44, %s45
      %p59 = scmp.eq.s32.totalorder %s16, 12
      %p60 = por %p58, %p59
      %p62 = scmp.ne.s32.totalorder %s45, %s61
      %p63 = scmp.eq.s32.totalorder %s16, 0
      %p64 = por %p62, %p63
      %s65 = ssub.s32 %s19, %s28
      %s66 = ssub.s32 %s18, %s32
      %s67 = sor.u32 %s65, %s66
      %p68 = scmp.eq.s32.totalorder %s67, 0
      %s70 = sadd.s32 %s69, 1
      %s71 = scalar_select %p68, %s69, %s70
      %p74 = pneg %p68
      %p75 = scmp.eq.s32.totalorder %s10, 12
      %p76 = por %p74, %p75
      %p77 = scmp.ne.s32.totalorder %s69, %s72
      %p78 = scmp.eq.s32.totalorder %s10, 0
      %p79 = por %p77, %p78
      %p80 = scmp.ne.s32.totalorder %s69, %s72
      %p81 = scmp.eq.s32.totalorder %s15, 12
      %p82 = por %p80, %p81
      %p83 = scmp.ne.s32.totalorder %s72, %s73
      %p84 = scmp.eq.s32.totalorder %s15, 0
      %p85 = por %p83, %p84
      %p86 = scmp.ne.s32.totalorder %s72, %s73
      %p87 = scmp.eq.s32.totalorder %s16, 12
      %p88 = por %p86, %p87
      %p90 = scmp.ne.s32.totalorder %s73, %s89
      %p91 = scmp.eq.s32.totalorder %s16, 0
      %p92 = por %p90, %p91
      %s93 = ssub.s32 %s18, %s32
      %p94 = scmp.eq.s32.totalorder %s93, 0
      %s96 = sadd.s32 %s95, 1
      %s97 = scalar_select %p94, %s95, %s96
      %p100 = pneg %p94
      %p101 = scmp.eq.s32.totalorder %s10, 12
      %p102 = por %p100, %p101
      %p103 = scmp.ne.s32.totalorder %s95, %s98
      %p104 = scmp.eq.s32.totalorder %s10, 0
      %p105 = por %p103, %p104
      %p106 = scmp.ne.s32.totalorder %s95, %s98
      %p107 = scmp.eq.s32.totalorder %s15, 12
      %p108 = por %p106, %p107
      %p109 = scmp.ne.s32.totalorder %s98, %s99
      %p110 = scmp.eq.s32.totalorder %s15, 0
      %p111 = por %p109, %p110
      %p112 = scmp.ne.s32.totalorder %s98, %s99
      %p113 = scmp.eq.s32.totalorder %s16, 12
      %p114 = por %p112, %p113
      %p116 = scmp.ne.s32.totalorder %s99, %s115
      %p117 = scmp.eq.s32.totalorder %s16, 0
      %p118 = por %p116, %p117
      %s119 = ssub.s32 %s18, %s32
      %p120 = scmp.eq.s32.totalorder %s119, 0
      %s122 = sadd.s32 %s121, 1
      %s123 = scalar_select %p120, %s121, %s122
      %p126 = pneg %p120
      %p127 = scmp.eq.s32.totalorder %s10, 12
      %p128 = por %p126, %p127
      %p129 = scmp.ne.s32.totalorder %s121, %s124
      %p130 = scmp.eq.s32.totalorder %s10, 0
      %p131 = por %p129, %p130
      %p132 = scmp.ne.s32.totalorder %s121, %s124
      %p133 = scmp.eq.s32.totalorder %s15, 12
      %p134 = por %p132, %p133
      %p135 = scmp.ne.s32.totalorder %s124, %s125
      %p136 = scmp.eq.s32.totalorder %s15, 0
      %p137 = por %p135, %p136
      %p138 = scmp.ne.s32.totalorder %s124, %s125
      %p139 = scmp.eq.s32.totalorder %s16, 12
      %p140 = por %p138, %p139
      %p142 = scmp.ne.s32.totalorder %s125, %s141
      %p143 = scmp.eq.s32.totalorder %s16, 0
      %p144 = por %p142, %p143
      %s145 = ssub.s32 %s17, %s36
      %s146 = ssub.s32 %s18, %s32
      %s147 = sor.u32 %s145, %s146
      %p148 = scmp.eq.s32.totalorder %s147, 0
      %s150 = sadd.s32 %s149, 1
      %s151 = scalar_select %p148, %s149, %s150
      %p154 = pneg %p148
      %p155 = scmp.eq.s32.totalorder %s10, 12
      %p156 = por %p154, %p155
      %p157 = scmp.ne.s32.totalorder %s149, %s152
      %p158 = scmp.eq.s32.totalorder %s10, 0
      %p159 = por %p157, %p158
      %p160 = scmp.ne.s32.totalorder %s149, %s152
      %p161 = scmp.eq.s32.totalorder %s15, 12
      %p162 = por %p160, %p161
      %p163 = scmp.ne.s32.totalorder %s152, %s153
      %p164 = scmp.eq.s32.totalorder %s15, 0
      %p165 = por %p163, %p164
      %p166 = scmp.ne.s32.totalorder %s152, %s153
      %p167 = scmp.eq.s32.totalorder %s16, 12
      %p168 = por %p166, %p167
      %p170 = scmp.ne.s32.totalorder %s153, %s169
      %p171 = scmp.eq.s32.totalorder %s16, 0
      %p172 = por %p170, %p171
      %p173 = scmp.le.s32.totalorder 1, %s10
      %p174 = scmp.lt.s32.totalorder %s10, 14
      %p175 = pnand %p173, %p174
      %p176 = pneg %p175
      // Predicated region
      $region9: #{discriminator_forward.4} parent=5 // pred_check
        _
      $region10: #{discriminator_forward.4} parent=5 // pred_check_branch
        %178 = sbr.rel (%p175) target = $region12
      $region11: #{discriminator_forward.4} parent=5 // pred_region
        %s179 = ssub.s32 %s10, 1
        // Predicated region
        $region13: #{discriminator_forward.4} parent=11 // pred_check
          %p180 = pneg %p111
        $region14: #{discriminator_forward.4} parent=11 // pred_check_branch
          %182 = sbr.rel (%p180) target = $region16
        $region15: #{discriminator_forward.4} parent=11 // pred_region
          %p183 = scmp.lt.s32.totalorder %s21, 0
          %s184 = scalar_select %p183, %s21, 0
          %s185 = scalar_lea.vmem %s2, %s184
        $region16: #{discriminator_forward.4} parent=11 // pred_fallthru
          _
        // Predicated region
        $region17: #{discriminator_forward.4} parent=11 // pred_check
          %p186 = pneg %p137
        $region18: #{discriminator_forward.4} parent=11 // pred_check_branch
          %188 = sbr.rel (%p186) target = $region20
        $region19: #{discriminator_forward.4} parent=11 // pred_region
          %p189 = scmp.lt.s32.totalorder %s21, 0
          %s190 = scalar_select %p189, %s21, 0
          %s191 = scalar_lea.vmem %s3, %s190
        $region20: #{discriminator_forward.4} parent=11 // pred_fallthru
          _
      $region12: #{discriminator_forward.4} parent=5 // pred_fallthru
        _
      %p192 = scmp.lt.s32.totalorder %s10, 13
      // Predicated region
      $region21: #{discriminator_forward.4} parent=5 // pred_check
        %p193 = pneg %p192
      $region22: #{discriminator_forward.4} parent=5 // pred_check_branch
        %195 = sbr.rel (%p193) target = $region24
      $region23: #{discriminator_forward.4} parent=5 // pred_region
        // Predicated region
        $region25: #{discriminator_forward.4} parent=23 // pred_check
          %p196 = pneg %p51
        $region26: #{discriminator_forward.4} parent=23 // pred_check_branch
          %198 = sbr.rel (%p196) target = $region28
        $region27: #{discriminator_forward.4} parent=23 // pred_region
          %s199 = sand.u32 %s41, 1
          %s200 = sand.u32 %s41, 1
          %s201 = smul.addr %s200, 16
          %s202 = scalar_lea.vmem [#allocation3], %s201
          %s203 = smul.u32 4, %s17
          %s204 = smul.addr %s203, 13
          %s205 = sadd.s32 %s19, %s204
          %s206 = smul.addr %s205, 4
          %s207 = scalar_lea.vmem %s0, %s206
          // Predicated region
          $region29: #{discriminator_forward.4} parent=27 // pred_check
            _
          $region30: #{discriminator_forward.4} parent=27 // pred_check_branch
            %209 = sbr.rel (0) target = $region32
          $region31: #{discriminator_forward.4} parent=27 // pred_region
            // Predicated region
            $region33: #{discriminator_forward.4} parent=31 // pred_check
              _
            $region34: #{discriminator_forward.4} parent=31 // pred_check_branch
              %211 = sbr.rel target = $region36
            $region35: #{discriminator_forward.4} parent=31 // pred_region
              // Predicated region
              $region48: #{discriminator_forward.4} parent=35 // pred_check
                _
              $region49: #{discriminator_forward.4} parent=35 // pred_check_branch
                %232 = sbr.rel (0) target = $region51
              $region50: #{discriminator_forward.4} parent=35 // pred_region
                loop: start=0, step=1, limit=1
                $region52: #{discriminator_forward.4} parent=50 // loop_pre_header
                  _
                $region53: #{discriminator_forward.4} parent=50 // loop_header
                  %s234 = sphi 0, %s238
                  %p235 = scmp.ge.s32.totalorder %s234, 1
                  %s239 = sphi %s207, %s207
                  %s240 = sphi %s202, %s202
                $region54: #{discriminator_forward.4} parent=50 // loop_header_branch
                  %237 = sbr.rel (%p235) target = $region58
                $region55: #{discriminator_forward.4} parent=50 // loop_body
                  _
                $region56: #{discriminator_forward.4} parent=50 // loop_footer
                  %s238 = sadd.s32 1, %s234
                $region57: #{discriminator_forward.4} parent=50 // loop_footer_branch
                  %233 = sbr.rel target = $region53
                $region58: #{discriminator_forward.4} parent=50 // loop_exit
                  _
                loop: start=0, step=1, limit=1
                $region59: #{discriminator_forward.4} parent=50 // loop_pre_header
                  _
                $region60: #{discriminator_forward.4} parent=50 // loop_header
                  %s243 = sphi 0, %s247
                  %p244 = scmp.ge.s32.totalorder %s243, 1
                  %s248 = sphi %s207, %s207
                  %s249 = sphi %s202, %s202
                $region61: #{discriminator_forward.4} parent=50 // loop_header_branch
                  %246 = sbr.rel (%p244) target = $region65
                $region62: #{discriminator_forward.4} parent=50 // loop_body
                  %v250 = vld [vmem:[%s248] sm:$0xf]
                  %251 = vst [vmem:[%s249] sm:$0xf] %v250
                  %v252 = vld [vmem:[%s248 + $0x34] sm:$0xf]
                  %253 = vst [vmem:[%s249 + $0x4] sm:$0xf] %v252
                  %v254 = vld [vmem:[%s248 + $0x68] sm:$0xf]
                  %255 = vst [vmem:[%s249 + $0x8] sm:$0xf] %v254
                  %v256 = vld [vmem:[%s248 + $0x9c] sm:$0xf]
                  %257 = vst [vmem:[%s249 + $0xc] sm:$0xf] %v256
                $region63: #{discriminator_forward.4} parent=50 // loop_footer
                  %s247 = sadd.s32 1, %s243
                $region64: #{discriminator_forward.4} parent=50 // loop_footer_branch
                  %242 = sbr.rel target = $region60
                $region65: #{discriminator_forward.4} parent=50 // loop_exit
                  _
              $region51: #{discriminator_forward.4} parent=35 // pred_fallthru
                _
            $region36: #{discriminator_forward.4} parent=31 // pred_fallthru
              _
            // Predicated region
            $region37: #{discriminator_forward.4} parent=31 // pred_check
              _
            $region38: #{discriminator_forward.4} parent=31 // pred_check_branch
              %213 = sbr.rel (0) target = $region40
            $region39: #{discriminator_forward.4} parent=31 // pred_region
              loop: start=0, step=1, limit=1
              $region41: #{discriminator_forward.4} parent=39 // loop_pre_header
                _
              $region42: #{discriminator_forward.4} parent=39 // loop_header
                %s216 = sphi 0, %s220
                %p217 = scmp.ge.s32.totalorder %s216, 1
                %s221 = sphi %s207, %s207
                %s222 = sphi %s202, %s202
              $region43: #{discriminator_forward.4} parent=39 // loop_header_branch
                %219 = sbr.rel (%p217) target = $region47
              $region44: #{discriminator_forward.4} parent=39 // loop_body
                %v223 = vld [vmem:[%s221] sm:$0xf]
                %224 = vst [vmem:[%s222] sm:$0xf] %v223
                %v225 = vld [vmem:[%s221 + $0x34] sm:$0xf]
                %226 = vst [vmem:[%s222 + $0x4] sm:$0xf] %v225
                %v227 = vld [vmem:[%s221 + $0x68] sm:$0xf]
                %228 = vst [vmem:[%s222 + $0x8] sm:$0xf] %v227
                %v229 = vld [vmem:[%s221 + $0x9c] sm:$0xf]
                %230 = vst [vmem:[%s222 + $0xc] sm:$0xf] %v229
              $region45: #{discriminator_forward.4} parent=39 // loop_footer
                %s220 = sadd.s32 1, %s216
              $region46: #{discriminator_forward.4} parent=39 // loop_footer_branch
                %215 = sbr.rel target = $region42
              $region47: #{discriminator_forward.4} parent=39 // loop_exit
                _
            $region40: #{discriminator_forward.4} parent=31 // pred_fallthru
              _
          $region32: #{discriminator_forward.4} parent=27 // pred_fallthru
            _
          %258 = vnop
        $region28: #{discriminator_forward.4} parent=23 // pred_fallthru
          _
        // Predicated region
        $region66: #{discriminator_forward.4} parent=23 // pred_check
          %p259 = pneg %p79
        $region67: #{discriminator_forward.4} parent=23 // pred_check_branch
          %261 = sbr.rel (%p259) target = $region69
        $region68: #{discriminator_forward.4} parent=23 // pred_region
          %s262 = smul.u32 16, %s19
          %p263 = scmp.lt.s32.totalorder %s262, 207
          %s264 = scalar_select %p263, %s262, 207
          %p265 = scmp.lt.s32.totalorder %s18, 0
          %s266 = scalar_select %p265, %s18, 0
          %s267 = sadd.s32 %s266, %s264
          %s268 = smul.addr %s267, 4
          %s269 = scalar_lea.vmem %s1, %s268
          %s270 = smul.u32 16, %s19
        $region69: #{discriminator_forward.4} parent=23 // pred_fallthru
          _
      $region24: #{discriminator_forward.4} parent=5 // pred_fallthru
        _
      %p271 = scmp.le.s32.totalorder 1, %s10
      %p272 = scmp.lt.s32.totalorder %s10, 14
      %p273 = pnand %p271, %p272
      %p274 = pneg %p273
      // Predicated region
      $region70: #{discriminator_forward.4} parent=5 // pred_check
        _
      $region71: #{discriminator_forward.4} parent=5 // pred_check_branch
        %276 = sbr.rel (%p273) target = $region73
      $region72: #{discriminator_forward.4} parent=5 // pred_region
        %s277 = ssub.s32 %s10, 1
        %s278 = sand.u32 %s44, 1
        %s279 = sand.u32 %s44, 1
        %s280 = smul.addr %s279, 16
        %s281 = scalar_lea.vmem [#allocation3], %s280
        // Predicated region
        $region74: #{discriminator_forward.4} parent=72 // pred_check
          %p282 = pneg %p57
        $region75: #{discriminator_forward.4} parent=72 // pred_check_branch
          %284 = sbr.rel (%p282) target = $region77
        $region76: #{discriminator_forward.4} parent=72 // pred_region
          _
        $region77: #{discriminator_forward.4} parent=72 // pred_fallthru
          _
        %s285 = sand.u32 %s44, 1
        %s286 = sand.u32 %s44, 1
        %s287 = smul.addr %s286, 16
        %s288 = scalar_lea.vmem [#allocation3], %s287
        %p289 = pneg %p57
        %p290 = pneg %p54
        %s291 = smul.u32 16, %s22
        %p292 = scmp.lt.s32.totalorder %s291, 207
        %s293 = scalar_select %p292, %s291, 207
        %p294 = scmp.lt.s32.totalorder %s21, 0
        %s295 = scalar_select %p294, %s21, 0
        %s296 = sadd.s32 %s295, %s293
        %s297 = smul.addr %s296, 4
        %s298 = scalar_lea.vmem %s1, %s297
        %p299 = pneg %p85
        %p300 = pneg %p82
        %p301 = scmp.lt.s32.totalorder %s21, 0
        %s302 = scalar_select %p301, %s21, 0
        %s303 = scalar_lea.vmem %s2, %s302
        %p304 = pneg %p111
        %p305 = pneg %p108
        %p306 = scmp.lt.s32.totalorder %s21, 0
        %s307 = scalar_select %p306, %s21, 0
        %s308 = scalar_lea.vmem %s3, %s307
        %p309 = pneg %p137
        %p310 = pneg %p134
        %p311 = pneg %p165
        %p312 = pneg %p162
        %s313 = smul.u32 4, %s20
        %p314 = scmp.lt.s32.totalorder %s313, 3
        %s315 = scalar_select %p314, %s313, 3
        %p316 = scmp.lt.s32.totalorder %s21, 0
        %s317 = scalar_select %p316, %s21, 0
        %s318 = sadd.s32 %s317, %s315
        %s319 = smul.addr %s318, 8
        %s320 = scalar_lea.vmem %s4, %s319
        %s321 = smul.u32 4, %s20
        %s322 = smul.u32 16, %s22
        %p323 = scmp.lt.s32.totalorder %s322, 207
        %s324 = scalar_select %p323, %s322, 207
        %p325 = scmp.lt.s32.totalorder %s21, 0
        %s326 = scalar_select %p325, %s21, 0
        %s327 = sadd.s32 %s326, %s324
        %s328 = smul.addr %s327, 4
        %s329 = scalar_lea.vmem %s1, %s328
        %s330 = smul.u32 16, %s22
        %p331 = scmp.lt.s32.totalorder %s21, 0
        %s332 = scalar_select %p331, %s21, 0
        %s333 = scalar_lea.vmem %s2, %s332
        %p334 = scmp.lt.s32.totalorder %s21, 0
        %s335 = scalar_select %p334, %s21, 0
        %s336 = scalar_lea.vmem %s3, %s335
        %s337 = smul.u32 4, %s20
        %p338 = scmp.lt.s32.totalorder %s337, 3
        %s339 = scalar_select %p338, %s337, 3
        %p340 = scmp.lt.s32.totalorder %s21, 0
        %s341 = scalar_select %p340, %s21, 0
        %s342 = sadd.s32 %s341, %s339
        %s343 = smul.addr %s342, 8
        %s344 = scalar_lea.vmem %s4, %s343
        %s345 = smul.u32 4, %s20
        %p347 = scmp.eq.s32.totalorder %s22, 0
        // Predicated region
        $region78: #{discriminator_forward.4} parent=72 // pred_check
          %p348 = pneg %p347
        $region79: #{discriminator_forward.4} parent=72 // pred_check_branch
          %350 = sbr.rel (%p348) target = $region81
        $region80: #{discriminator_forward.4} parent=72 // pred_region
          %351 = vst [vmem:[#allocation2] sm:$0xff] 0.0
          %352 = vst [vmem:[#allocation2 + $0x8] sm:$0xff] 0.0
          %353 = vst [vmem:[#allocation2 + $0x10] sm:$0xff] 0.0
          %354 = vst [vmem:[#allocation2 + $0x18] sm:$0xff] 0.0
        $region81: #{discriminator_forward.4} parent=72 // pred_fallthru
          _
        %v355 = vld [vmem:[#allocation2] sm:$0xff]
        %v356 = vld [vmem:[#allocation2 + $0x8] sm:$0xff]
        %v357 = vld [vmem:[#allocation2 + $0x10] sm:$0xff]
        %v358 = vld [vmem:[#allocation2 + $0x18] sm:$0xff]
        %v359 = vld [vmem:[%s281] sm:$0xf]
        %v360 = vld [vmem:[%s281 + $0x4] sm:$0xf]
        %v361 = vld [vmem:[%s281 + $0x8] sm:$0xf]
        %v362 = vld [vmem:[%s281 + $0xc] sm:$0xf]
        %v363 = vld [vmem:[%s329] sm:$0xf]
        %v364 = vld [vmem:[%s329 + $0x4] sm:$0xf]
        %v365 = vld [vmem:[%s329 + $0x8] sm:$0xf]
        %v366 = vld [vmem:[%s329 + $0xc] sm:$0xf]
        %v367 = vld [vmem:[%s329 + $0x10] sm:$0xf]
        %v368 = vld [vmem:[%s329 + $0x14] sm:$0xf]
        %v369 = vld [vmem:[%s329 + $0x18] sm:$0xf]
        %v370 = vld [vmem:[%s329 + $0x1c] sm:$0xf]
        %v371 = vld [vmem:[%s329 + $0x20] sm:$0xf]
        %v372 = vld [vmem:[%s329 + $0x24] sm:$0xf]
        %v373 = vld [vmem:[%s329 + $0x28] sm:$0xf]
        %v374 = vld [vmem:[%s329 + $0x2c] sm:$0xf]
        %v375 = vld [vmem:[%s329 + $0x30] sm:$0xf]
        %v376 = vld [vmem:[%s329 + $0x34] sm:$0xf]
        %v377 = vld [vmem:[%s329 + $0x38] sm:$0xf]
        %v378 = vld [vmem:[%s329 + $0x3c] sm:$0xf]
        %v383 = vunpack.c.l.b16 %v359
        %v384 = vunpack.c.l.b16 %v360
        %v385 = vunpack.c.l.b16 %v361
        %v386 = vunpack.c.l.b16 %v362
        %v387 = vpack.c.b16 %v384, %v383
        %v388 = vpack.c.b16 %v386, %v385
        %v407 = vunpack.c.l.b16 %v363
        %v408 = vunpack.c.l.b16 %v364
        %v409 = vunpack.c.l.b16 %v365
        %v410 = vunpack.c.l.b16 %v366
        %v411 = vunpack.c.l.b16 %v367
        %v412 = vunpack.c.l.b16 %v368
        %v413 = vunpack.c.l.b16 %v369
        %v414 = vunpack.c.l.b16 %v370
        %v415 = vunpack.c.l.b16 %v371
        %v416 = vunpack.c.l.b16 %v372
        %v417 = vunpack.c.l.b16 %v373
        %v418 = vunpack.c.l.b16 %v374
        %v419 = vunpack.c.l.b16 %v375
        %v420 = vunpack.c.l.b16 %v376
        %v421 = vunpack.c.l.b16 %v377
        %v422 = vunpack.c.l.b16 %v378
        %v423 = vpack.c.b16 %v408, %v407
        %v424 = vpack.c.b16 %v410, %v409
        %v425 = vpack.c.b16 %v412, %v411
        %v426 = vpack.c.b16 %v414, %v413
        %v427 = vpack.c.b16 %v416, %v415
        %v428 = vpack.c.b16 %v418, %v417
        %v429 = vpack.c.b16 %v420, %v419
        %v430 = vpack.c.b16 %v422, %v421
        %439 = vmatprep.subr.bf16.mxu0 0
        %440 = vmatpush1.bf16.msra.mxu0 %v423
        %441 = vmatprep.subr.bf16.mxu0 0
        %442 = vmatpush1.bf16.msra.mxu0 %v424
        %443 = vmatprep.subr.bf16.mxu0 0
        %444 = vmatpush1.bf16.msra.mxu0 %v425
        %445 = vmatprep.subr.bf16.mxu0 0
        %446 = vmatpush1.bf16.msra.mxu0 %v426
        %447 = vmatprep.subr.bf16.mxu0 0
        %448 = vmatpush1.bf16.msra.mxu0 %v427
        %449 = vmatprep.subr.bf16.mxu0 0
        %450 = vmatpush1.bf16.msra.mxu0 %v428
        %451 = vmatprep.subr.bf16.mxu0 0
        %452 = vmatpush1.bf16.msra.mxu0 %v429
        %453 = vmatprep.subr.bf16.mxu0 0
        %454 = vmatpush1.bf16.msra.mxu0 %v430
        %455 = vmatprep.subr.bf16.mxu0 0
        %456 = vmatpush1.bf16.msra.mxu0 0
        %457 = vmatprep.subr.bf16.mxu0 0
        %458 = vmatpush1.bf16.msra.mxu0 0
        %459 = vmatprep.subr.bf16.mxu0 0
        %460 = vmatpush1.bf16.msra.mxu0 0
        %461 = vmatprep.subr.bf16.mxu0 0
        %462 = vmatpush1.bf16.msra.mxu0 0
        %463 = vmatprep.subr.bf16.mxu0 0
        %464 = vmatpush1.bf16.msra.mxu0 0
        %465 = vmatprep.subr.bf16.mxu0 0
        %466 = vmatpush1.bf16.msra.mxu0 0
        %467 = vmatprep.subr.bf16.mxu0 0
        %468 = vmatpush1.bf16.msra.mxu0 0
        %469 = vmatprep.subr.bf16.mxu0 0
        %470 = vmatpush1.bf16.msra.mxu0 0
        %471 = vmatprep.mubr.bf16.mxu0 0
        %472 = vmatmul.mubr.bf16.gmra.mrb[0].mxu0 %v387
        %v473 = vpop.f32.mrb[0].mxu0
        %v474 = vadd.f32 0.0, %v473
        %v475 = vpop.f32.mrb[0].mxu0
        %v476 = vpop.f32.mrb[0].mxu0
        %v477 = vadd.f32 0.0, %v476
        %v478 = vpop.f32.mrb[0].mxu0
        %479 = vmatprep.mubr.bf16.mxu0 0
        %480 = vmatmul.mubr.bf16.gmra.mrb[0].mxu0 %v388
        %v481 = vpop.f32.mrb[0].mxu0
        %v482 = vadd.f32 0.0, %v481
        %v483 = vpop.f32.mrb[0].mxu0
        %v484 = vpop.f32.mrb[0].mxu0
        %v485 = vadd.f32 0.0, %v484
        %v486 = vpop.f32.mrb[0].mxu0
        %487 = vdwg.mxu0
        %v488 = vadd.f32 %v355, %v474
        %v489 = vadd.f32 %v356, %v477
        %v490 = vadd.f32 %v357, %v482
        %v491 = vadd.f32 %v358, %v485
        %492 = vst [vmem:[#allocation2] sm:$0xff] %v488
        %493 = vst [vmem:[#allocation2 + $0x8] sm:$0xff] %v489
        %494 = vst [vmem:[#allocation2 + $0x10] sm:$0xff] %v490
        %495 = vst [vmem:[#allocation2 + $0x18] sm:$0xff] %v491
        %p496 = scmp.eq.s32.totalorder %s22, 12
        // Predicated region
        $region82: #{discriminator_forward.4} parent=72 // pred_check
          %p497 = pneg %p496
        $region83: #{discriminator_forward.4} parent=72 // pred_check_branch
          %499 = sbr.rel (%p497) target = $region85
        $region84: #{discriminator_forward.4} parent=72 // pred_region
          %v500 = vld [vmem:[#allocation2] sm:$0xff]
          %v501 = vld [vmem:[#allocation2 + $0x8] sm:$0xff]
          %v502 = vld [vmem:[#allocation2 + $0x10] sm:$0xff]
          %v503 = vld [vmem:[#allocation2 + $0x18] sm:$0xff]
          %v504 = vld [vmem:[%s333] sm:$0x1]
          %v506 = vlaneseq
          %v507 = vshrl.u32 %v506, 7
          %v508 = vsub.s32 0, %v507
          %v509 = vrot.slane %v504, %v508
          %v511 = vmul.f32 %v500, %v509
          %v512 = vmul.f32 %v501, %v509
          %v513 = vmul.f32 %v502, %v509
          %v514 = vmul.f32 %v503, %v509
          %v515 = vld [vmem:[%s336] sm:$0x1]
          %v517 = vlaneseq
          %v518 = vshrl.u32 %v517, 7
          %v519 = vsub.s32 0, %v518
          %v520 = vrot.slane %v515, %v519
          %v522 = vadd.f32 %v511, %v520
          %v523 = vadd.f32 %v512, %v520
          %v524 = vadd.f32 %v513, %v520
          %v525 = vadd.f32 %v514, %v520
          %vm526 = vcmp.ge.f32.partialorder %v522, 0.0
          %vm527 = vcmp.ge.f32.partialorder %v523, 0.0
          %vm528 = vcmp.ge.f32.partialorder %v524, 0.0
          %vm529 = vcmp.ge.f32.partialorder %v525, 0.0
          %v530 = vmul.f32 %v522, 0.01
          %v531 = vmul.f32 %v523, 0.01
          %v532 = vmul.f32 %v524, 0.01
          %v533 = vmul.f32 %v525, 0.01
          %v534 = vsel %vm526, %v522, %v530
          %v535 = vsel %vm527, %v523, %v531
          %v536 = vsel %vm528, %v524, %v532
          %v537 = vsel %vm529, %v525, %v533
          %538 = vst [vmem:[%s344] sm:$0xff] %v534
          %539 = vst [vmem:[%s344 + $0x8] sm:$0xff] %v535
          %540 = vst [vmem:[%s344 + $0x10] sm:$0xff] %v536
          %541 = vst [vmem:[%s344 + $0x18] sm:$0xff] %v537
        $region85: #{discriminator_forward.4} parent=72 // pred_fallthru
          _
        %s542 = smul.u32 4, %s20
        %p543 = scmp.lt.s32.totalorder %s542, 3
        %s544 = scalar_select %p543, %s542, 3
        %p545 = scmp.lt.s32.totalorder %s21, 0
        %s546 = scalar_select %p545, %s21, 0
        %s547 = sadd.s32 %s546, %s544
        %s548 = smul.addr %s547, 8
        %s549 = scalar_lea.vmem %s4, %s548
        // Predicated region
        $region86: #{discriminator_forward.4} parent=72 // pred_check
          %p550 = pneg %p162
        $region87: #{discriminator_forward.4} parent=72 // pred_check_branch
          %552 = sbr.rel (%p550) target = $region89
        $region88: #{discriminator_forward.4} parent=72 // pred_region
          %s553 = smul.u32 4, %s20
        $region89: #{discriminator_forward.4} parent=72 // pred_fallthru
          _
        // Predicated region
        $region90: #{discriminator_forward.4} parent=72 // pred_check
          %p554 = pneg %p162
        $region91: #{discriminator_forward.4} parent=72 // pred_check_branch
          %556 = sbr.rel (%p554) target = $region93
        $region92: #{discriminator_forward.4} parent=72 // pred_region
          %s557 = smul.u32 4, %s20
          %p558 = scmp.lt.s32.totalorder %s557, 3
          %s559 = scalar_select %p558, %s557, 3
          %p560 = scmp.lt.s32.totalorder %s21, 0
          %s561 = scalar_select %p560, %s21, 0
          %s562 = sadd.s32 %s561, %s559
          %s563 = smul.addr %s562, 8
          %s564 = scalar_lea.vmem %s4, %s563
        $region93: #{discriminator_forward.4} parent=72 // pred_fallthru
          _
      $region73: #{discriminator_forward.4} parent=5 // pred_fallthru
        _
      %p565 = scmp.le.s32.totalorder 2, %s10
      // Predicated region
      $region94: #{discriminator_forward.4} parent=5 // pred_check
        %p566 = pneg %p565
      $region95: #{discriminator_forward.4} parent=5 // pred_check_branch
        %568 = sbr.rel (%p566) target = $region97
      $region96: #{discriminator_forward.4} parent=5 // pred_region
        %s569 = ssub.s32 %s10, 2
      $region97: #{discriminator_forward.4} parent=5 // pred_fallthru
        _
    $region6: #{discriminator_forward.4} parent=1 // loop_footer
      %s14 = sadd.s32 1, %s10
    $region7: #{discriminator_forward.4} parent=1 // loop_footer_branch
      %9 = sbr.rel target = $region3
    $region8: #{discriminator_forward.4} parent=1 // loop_exit
      _

// kernel: discriminator_forward.5
$region0: #{discriminator_forward.5}
  #allocation0 [shape = 'u32[]', space=smem, size = 0x4, offset = 0x4, fixed_abs, tag = 'smem constant byte address 0x4 - core index']
  #allocation1 [shape = 'u32[144,128]{1,0:T(1,128)}', space=vmem, size = 0x12000, scoped, tag = 'internal scratch']
  #allocation2 [shape = 'f32[8,512]{1,0:T(8,128)}', space=vmem, size = 0x4000, scoped, tag = 'scratch operand']
  #allocation3 [shape = 'f32[1,1]{1,0:T(1,128)S(1)}', space=vmem, size = 0x200, scoped, tag = 'scoped memory for discriminator_forward.5']
  %s0 = inlined_call_operand.vmem [shape: bf16[8,2048], index: 0, kind: input, shape index: {}]
  %s1 = inlined_call_operand.vmem [shape: bf16[2048,512], index: 1, kind: input, shape index: {}]
  %s2 = inlined_call_operand.vmem [shape: f32[1,512], index: 2, kind: input, shape index: {}]
  %s3 = inlined_call_operand.vmem [shape: f32[1,512], index: 3, kind: input, shape index: {}]
  %s4 = inlined_call_operand.vmem [shape: f32[1,512], index: 4, kind: input, shape index: {}]
  %s5 = inlined_call_operand.<no memory space> [shape: f32[1,1], index: 5, kind: input, shape index: {}]
  %s6 = inlined_call_operand.vmem [shape: f32[8,1], index: 6, kind: output, shape index: {}]
  %s7 = sld [smem:[#allocation0]]
  $region65: #{discriminator_forward.5} parent=0
    _
  %s9 = ssub.s32 1, %s7
  %s10 = scalar_select 0, %s9, %s7
  %v11 = vstv %s5
  %12 = vst [vmem:[#allocation3] sm:$0x1] %v11
  loop: start=0, step=1, limit=6
  $region2: #{discriminator_forward.5} parent=0 // loop_pre_header
    _
  $region3: #{discriminator_forward.5} parent=0 // loop_header
    %s14 = sphi 0, %s18
    %p15 = scmp.ge.s32.totalorder %s14, 6
    %s21 = sphi 0, %s33
    %s22 = sphi 0, %s29
    %s23 = sphi 0, %s21
    %s24 = sphi 0, %s22
    %s25 = sphi 0, %s23
    %s26 = sphi 0, %s24
    %s38 = sphi 0, %s40
    %s41 = sphi 0, %s38
    %s42 = sphi 0, %s41
    %s58 = sphi 0, %s42
    %s64 = sphi 0, %s66
    %s67 = sphi 0, %s64
    %s68 = sphi 0, %s67
    %s84 = sphi 0, %s68
    %s88 = sphi 0, %s88
    %s90 = sphi 0, %s88
    %s91 = sphi 0, %s90
    %s105 = sphi 0, %s91
    %s109 = sphi 0, %s109
    %s111 = sphi 0, %s109
    %s112 = sphi 0, %s111
    %s126 = sphi 0, %s112
    %s130 = sphi 0, %s130
    %s132 = sphi 0, %s130
    %s133 = sphi 0, %s132
    %s147 = sphi 0, %s133
    %s151 = sphi 0, %s151
    %s153 = sphi 0, %s151
    %s154 = sphi 0, %s153
    %s168 = sphi 0, %s154
    %s174 = sphi 0, %s176
    %s177 = sphi 0, %s174
    %s178 = sphi 0, %s177
    %s194 = sphi 0, %s178
  $region4: #{discriminator_forward.5} parent=0 // loop_header_branch
    %17 = sbr.rel (%p15) target = $region8
  $region5: #{discriminator_forward.5} parent=0 // loop_body
    %s19 = ssub.s32 %s14, 1
    %s20 = ssub.s32 %s14, 2
    %s27 = sadd.s32 1, %s22
    %p28 = scmp.ge.s32.totalorder %s27, 4
    %s29 = scalar_select %p28, 0, %s27
    %s30 = sadd.s32 1, %s21
    %s31 = scalar_select %p28, %s30, %s21
    %p32 = scmp.ge.s32.totalorder %s31, 1
    %s33 = scalar_select %p32, 0, %s31
    %s34 = ssub.s32 %s21, %s33
    %s35 = ssub.s32 %s22, %s29
    %s36 = sor.u32 %s34, %s35
    %p37 = scmp.eq.s32.totalorder %s36, 0
    %s39 = sadd.s32 %s38, 1
    %s40 = scalar_select %p37, %s38, %s39
    %p43 = pneg %p37
    %p44 = scmp.eq.s32.totalorder %s14, 3
    %p45 = por %p43, %p44
    %p46 = scmp.ne.s32.totalorder %s38, %s41
    %p47 = scmp.eq.s32.totalorder %s14, 0
    %p48 = por %p46, %p47
    %p49 = scmp.ne.s32.totalorder %s38, %s41
    %p50 = scmp.eq.s32.totalorder %s19, 3
    %p51 = por %p49, %p50
    %p52 = scmp.ne.s32.totalorder %s41, %s42
    %p53 = scmp.eq.s32.totalorder %s19, 0
    %p54 = por %p52, %p53
    %p55 = scmp.ne.s32.totalorder %s41, %s42
    %p56 = scmp.eq.s32.totalorder %s20, 3
    %p57 = por %p55, %p56
    %p59 = scmp.ne.s32.totalorder %s42, %s58
    %p60 = scmp.eq.s32.totalorder %s20, 0
    %p61 = por %p59, %p60
    %s62 = ssub.s32 %s22, %s29
    %p63 = scmp.eq.s32.totalorder %s62, 0
    %s65 = sadd.s32 %s64, 1
    %s66 = scalar_select %p63, %s64, %s65
    %p69 = pneg %p63
    %p70 = scmp.eq.s32.totalorder %s14, 3
    %p71 = por %p69, %p70
    %p72 = scmp.ne.s32.totalorder %s64, %s67
    %p73 = scmp.eq.s32.totalorder %s14, 0
    %p74 = por %p72, %p73
    %p75 = scmp.ne.s32.totalorder %s64, %s67
    %p76 = scmp.eq.s32.totalorder %s19, 3
    %p77 = por %p75, %p76
    %p78 = scmp.ne.s32.totalorder %s67, %s68
    %p79 = scmp.eq.s32.totalorder %s19, 0
    %p80 = por %p78, %p79
    %p81 = scmp.ne.s32.totalorder %s67, %s68
    %p82 = scmp.eq.s32.totalorder %s20, 3
    %p83 = por %p81, %p82
    %p85 = scmp.ne.s32.totalorder %s68, %s84
    %p86 = scmp.eq.s32.totalorder %s20, 0
    %p87 = por %p85, %p86
    %s89 = sadd.s32 %s88, 1
    %p92 = scmp.eq.s32.totalorder %s14, 3
    %p93 = scmp.ne.s32.totalorder %s88, %s90
    %p94 = scmp.eq.s32.totalorder %s14, 0
    %p95 = por %p93, %p94
    %p96 = scmp.ne.s32.totalorder %s88, %s90
    %p97 = scmp.eq.s32.totalorder %s19, 3
    %p98 = por %p96, %p97
    %p99 = scmp.ne.s32.totalorder %s90, %s91
    %p100 = scmp.eq.s32.totalorder %s19, 0
    %p101 = por %p99, %p100
    %p102 = scmp.ne.s32.totalorder %s90, %s91
    %p103 = scmp.eq.s32.totalorder %s20, 3
    %p104 = por %p102, %p103
    %p106 = scmp.ne.s32.totalorder %s91, %s105
    %p107 = scmp.eq.s32.totalorder %s20, 0
    %p108 = por %p106, %p107
    %s110 = sadd.s32 %s109, 1
    %p113 = scmp.eq.s32.totalorder %s14, 3
    %p114 = scmp.ne.s32.totalorder %s109, %s111
    %p115 = scmp.eq.s32.totalorder %s14, 0
    %p116 = por %p114, %p115
    %p117 = scmp.ne.s32.totalorder %s109, %s111
    %p118 = scmp.eq.s32.totalorder %s19, 3
    %p119 = por %p117, %p118
    %p120 = scmp.ne.s32.totalorder %s111, %s112
    %p121 = scmp.eq.s32.totalorder %s19, 0
    %p122 = por %p120, %p121
    %p123 = scmp.ne.s32.totalorder %s111, %s112
    %p124 = scmp.eq.s32.totalorder %s20, 3
    %p125 = por %p123, %p124
    %p127 = scmp.ne.s32.totalorder %s112, %s126
    %p128 = scmp.eq.s32.totalorder %s20, 0
    %p129 = por %p127, %p128
    %s131 = sadd.s32 %s130, 1
    %p134 = scmp.eq.s32.totalorder %s14, 3
    %p135 = scmp.ne.s32.totalorder %s130, %s132
    %p136 = scmp.eq.s32.totalorder %s14, 0
    %p137 = por %p135, %p136
    %p138 = scmp.ne.s32.totalorder %s130, %s132
    %p139 = scmp.eq.s32.totalorder %s19, 3
    %p140 = por %p138, %p139
    %p141 = scmp.ne.s32.totalorder %s132, %s133
    %p142 = scmp.eq.s32.totalorder %s19, 0
    %p143 = por %p141, %p142
    %p144 = scmp.ne.s32.totalorder %s132, %s133
    %p145 = scmp.eq.s32.totalorder %s20, 3
    %p146 = por %p144, %p145
    %p148 = scmp.ne.s32.totalorder %s133, %s147
    %p149 = scmp.eq.s32.totalorder %s20, 0
    %p150 = por %p148, %p149
    %s152 = sadd.s32 %s151, 1
    %p155 = scmp.eq.s32.totalorder %s14, 3
    %p156 = scmp.ne.s32.totalorder %s151, %s153
    %p157 = scmp.eq.s32.totalorder %s14, 0
    %p158 = por %p156, %p157
    %p159 = scmp.ne.s32.totalorder %s151, %s153
    %p160 = scmp.eq.s32.totalorder %s19, 3
    %p161 = por %p159, %p160
    %p162 = scmp.ne.s32.totalorder %s153, %s154
    %p163 = scmp.eq.s32.totalorder %s19, 0
    %p164 = por %p162, %p163
    %p165 = scmp.ne.s32.totalorder %s153, %s154
    %p166 = scmp.eq.s32.totalorder %s20, 3
    %p167 = por %p165, %p166
    %p169 = scmp.ne.s32.totalorder %s154, %s168
    %p170 = scmp.eq.s32.totalorder %s20, 0
    %p171 = por %p169, %p170
    %s172 = ssub.s32 %s21, %s33
    %p173 = scmp.eq.s32.totalorder %s172, 0
    %s175 = sadd.s32 %s174, 1
    %s176 = scalar_select %p173, %s174, %s175
    %p179 = pneg %p173
    %p180 = scmp.eq.s32.totalorder %s14, 3
    %p181 = por %p179, %p180
    %p182 = scmp.ne.s32.totalorder %s174, %s177
    %p183 = scmp.eq.s32.totalorder %s14, 0
    %p184 = por %p182, %p183
    %p185 = scmp.ne.s32.totalorder %s174, %s177
    %p186 = scmp.eq.s32.totalorder %s19, 3
    %p187 = por %p185, %p186
    %p188 = scmp.ne.s32.totalorder %s177, %s178
    %p189 = scmp.eq.s32.totalorder %s19, 0
    %p190 = por %p188, %p189
    %p191 = scmp.ne.s32.totalorder %s177, %s178
    %p192 = scmp.eq.s32.totalorder %s20, 3
    %p193 = por %p191, %p192
    %p195 = scmp.ne.s32.totalorder %s178, %s194
    %p196 = scmp.eq.s32.totalorder %s20, 0
    %p197 = por %p195, %p196
    %p198 = scmp.le.s32.totalorder 1, %s14
    %p199 = scmp.lt.s32.totalorder %s14, 5
    %p200 = pnand %p198, %p199
    %p201 = pneg %p200
    // Predicated region
    $region9: #{discriminator_forward.5} parent=5 // pred_check
      _
    $region10: #{discriminator_forward.5} parent=5 // pred_check_branch
      %203 = sbr.rel (%p200) target = $region12
    $region11: #{discriminator_forward.5} parent=5 // pred_region
      %s204 = ssub.s32 %s14, 1
      // Predicated region
      $region13: #{discriminator_forward.5} parent=11 // pred_check
        %p205 = pneg %p101
      $region14: #{discriminator_forward.5} parent=11 // pred_check_branch
        %207 = sbr.rel (%p205) target = $region16
      $region15: #{discriminator_forward.5} parent=11 // pred_region
        _
      $region16: #{discriminator_forward.5} parent=11 // pred_fallthru
        _
      // Predicated region
      $region17: #{discriminator_forward.5} parent=11 // pred_check
        %p208 = pneg %p122
      $region18: #{discriminator_forward.5} parent=11 // pred_check_branch
        %210 = sbr.rel (%p208) target = $region20
      $region19: #{discriminator_forward.5} parent=11 // pred_region
        _
      $region20: #{discriminator_forward.5} parent=11 // pred_fallthru
        _
      // Predicated region
      $region21: #{discriminator_forward.5} parent=11 // pred_check
        %p211 = pneg %p143
      $region22: #{discriminator_forward.5} parent=11 // pred_check_branch
        %213 = sbr.rel (%p211) target = $region24
      $region23: #{discriminator_forward.5} parent=11 // pred_region
        _
      $region24: #{discriminator_forward.5} parent=11 // pred_fallthru
        _
      // Predicated region
      $region25: #{discriminator_forward.5} parent=11 // pred_check
        %p214 = pneg %p164
      $region26: #{discriminator_forward.5} parent=11 // pred_check_branch
        %216 = sbr.rel (%p214) target = $region28
      $region27: #{discriminator_forward.5} parent=11 // pred_region
        _
      $region28: #{discriminator_forward.5} parent=11 // pred_fallthru
        _
    $region12: #{discriminator_forward.5} parent=5 // pred_fallthru
      _
    %p217 = scmp.lt.s32.totalorder %s14, 4
    // Predicated region
    $region29: #{discriminator_forward.5} parent=5 // pred_check
      %p218 = pneg %p217
    $region30: #{discriminator_forward.5} parent=5 // pred_check_branch
      %220 = sbr.rel (%p218) target = $region32
    $region31: #{discriminator_forward.5} parent=5 // pred_region
      // Predicated region
      $region33: #{discriminator_forward.5} parent=31 // pred_check
        %p221 = pneg %p48
      $region34: #{discriminator_forward.5} parent=31 // pred_check_branch
        %223 = sbr.rel (%p221) target = $region36
      $region35: #{discriminator_forward.5} parent=31 // pred_region
        %s224 = smul.u32 4, %s22
        %p225 = scmp.lt.s32.totalorder %s21, 0
        %s226 = scalar_select %p225, %s21, 0
        %p227 = scmp.lt.s32.totalorder %s224, 15
        %s228 = scalar_select %p227, %s224, 15
        %s229 = smul.addr %s226, 16
        %s230 = sadd.s32 %s228, %s229
        %s231 = smul.addr %s230, 4
        %s232 = scalar_lea.vmem %s0, %s231
        %s233 = smul.u32 4, %s22
      $region36: #{discriminator_forward.5} parent=31 // pred_fallthru
        _
      // Predicated region
      $region37: #{discriminator_forward.5} parent=31 // pred_check
        %p234 = pneg %p74
      $region38: #{discriminator_forward.5} parent=31 // pred_check_branch
        %236 = sbr.rel (%p234) target = $region40
      $region39: #{discriminator_forward.5} parent=31 // pred_region
        %s237 = smul.u32 64, %s22
        %p238 = scmp.lt.s32.totalorder %s237, 255
        %s239 = scalar_select %p238, %s237, 255
        %s240 = smul.addr %s239, 4
        %s241 = smul.addr %s240, 4
        %s242 = scalar_lea.vmem %s1, %s241
        %s243 = smul.u32 64, %s22
      $region40: #{discriminator_forward.5} parent=31 // pred_fallthru
        _
    $region32: #{discriminator_forward.5} parent=5 // pred_fallthru
      _
    %p244 = scmp.le.s32.totalorder 1, %s14
    %p245 = scmp.lt.s32.totalorder %s14, 5
    %p246 = pnand %p244, %p245
    %p247 = pneg %p246
    // Predicated region
    $region41: #{discriminator_forward.5} parent=5 // pred_check
      _
    $region42: #{discriminator_forward.5} parent=5 // pred_check_branch
      %249 = sbr.rel (%p246) target = $region44
    $region43: #{discriminator_forward.5} parent=5 // pred_region
      %s250 = ssub.s32 %s14, 1
      %s251 = smul.u32 4, %s24
      %p252 = scmp.lt.s32.totalorder %s23, 0
      %s253 = scalar_select %p252, %s23, 0
      %p254 = scmp.lt.s32.totalorder %s251, 15
      %s255 = scalar_select %p254, %s251, 15
      %s256 = smul.addr %s253, 16
      %s257 = sadd.s32 %s255, %s256
      %s258 = smul.addr %s257, 4
      %s259 = scalar_lea.vmem %s0, %s258
      %p260 = pneg %p54
      %p261 = pneg %p51
      %s262 = smul.u32 64, %s24
      %p263 = scmp.lt.s32.totalorder %s262, 255
      %s264 = scalar_select %p263, %s262, 255
      %s265 = smul.addr %s264, 4
      %s266 = smul.addr %s265, 4
      %s267 = scalar_lea.vmem %s1, %s266
      %p268 = pneg %p80
      %p269 = pneg %p77
      %p270 = pneg %p101
      %p271 = pneg %p98
      %p272 = pneg %p122
      %p273 = pneg %p119
      %p274 = pneg %p143
      %p275 = pneg %p140
      %p276 = pneg %p164
      %p277 = pneg %p161
      %p278 = pneg %p190
      %p279 = pneg %p187
      %p280 = scmp.lt.s32.totalorder %s23, 0
      %s281 = scalar_select %p280, %s23, 0
      %s282 = smul.addr %s281, 8
      %s283 = scalar_lea.vmem %s6, %s282
      %s284 = smul.u32 4, %s24
      %p285 = scmp.lt.s32.totalorder %s23, 0
      %s286 = scalar_select %p285, %s23, 0
      %p287 = scmp.lt.s32.totalorder %s284, 15
      %s288 = scalar_select %p287, %s284, 15
      %s289 = smul.addr %s286, 16
      %s290 = sadd.s32 %s288, %s289
      %s291 = smul.addr %s290, 4
      %s292 = scalar_lea.vmem %s0, %s291
      %s293 = smul.u32 4, %s24
      %s294 = smul.u32 64, %s24
      %p295 = scmp.lt.s32.totalorder %s294, 255
      %s296 = scalar_select %p295, %s294, 255
      %s297 = smul.addr %s296, 4
      %s298 = smul.addr %s297, 4
      %s299 = scalar_lea.vmem %s1, %s298
      %s300 = smul.u32 64, %s24
      %p301 = scmp.lt.s32.totalorder %s23, 0
      %s302 = scalar_select %p301, %s23, 0
      %s303 = smul.addr %s302, 8
      %s304 = scalar_lea.vmem %s6, %s303
      %p305 = scmp.eq.s32.totalorder %s24, 0
      // Predicated region
      $region45: #{discriminator_forward.5} parent=43 // pred_check
        %p306 = pneg %p305
      $region46: #{discriminator_forward.5} parent=43 // pred_check_branch
        %308 = sbr.rel (%p306) target = $region48
      $region47: #{discriminator_forward.5} parent=43 // pred_region
        %309 = vst [vmem:[#allocation2] sm:$0xff] 0.0
        %310 = vst [vmem:[#allocation2 + $0x8] sm:$0xff] 0.0
        %311 = vst [vmem:[#allocation2 + $0x10] sm:$0xff] 0.0
        %312 = vst [vmem:[#allocation2 + $0x18] sm:$0xff] 0.0
      $region48: #{discriminator_forward.5} parent=43 // pred_fallthru
        _
      %v313 = vld [vmem:[#allocation2] sm:$0xff]
      %v314 = vld [vmem:[#allocation2 + $0x8] sm:$0xff]
      %v315 = vld [vmem:[#allocation2 + $0x10] sm:$0xff]
      %v316 = vld [vmem:[#allocation2 + $0x18] sm:$0xff]
      %v317 = vld [vmem:[%s292] sm:$0xff]
      %v318 = vld [vmem:[%s292 + $0x8] sm:$0xff]
      %v319 = vld [vmem:[%s299] sm:$0xff]
      %v320 = vld [vmem:[%s299 + $0x8] sm:$0xff]
      %v321 = vld [vmem:[%s299 + $0x10] sm:$0xff]
      %v322 = vld [vmem:[%s299 + $0x18] sm:$0xff]
      %v323 = vld [vmem:[%s299 + $0x20] sm:$0xff]
      %v324 = vld [vmem:[%s299 + $0x28] sm:$0xff]
      %v325 = vld [vmem:[%s299 + $0x30] sm:$0xff]
      %v326 = vld [vmem:[%s299 + $0x38] sm:$0xff]
      %v327 = vld [vmem:[%s299 + $0x40] sm:$0xff]
      %v328 = vld [vmem:[%s299 + $0x48] sm:$0xff]
      %v329 = vld [vmem:[%s299 + $0x50] sm:$0xff]
      %v330 = vld [vmem:[%s299 + $0x58] sm:$0xff]
      %v331 = vld [vmem:[%s299 + $0x60] sm:$0xff]
      %v332 = vld [vmem:[%s299 + $0x68] sm:$0xff]
      %v333 = vld [vmem:[%s299 + $0x70] sm:$0xff]
      %v334 = vld [vmem:[%s299 + $0x78] sm:$0xff]
      %v335 = vld [vmem:[%s299 + $0x80] sm:$0xff]
      %v336 = vld [vmem:[%s299 + $0x88] sm:$0xff]
      %v337 = vld [vmem:[%s299 + $0x90] sm:$0xff]
      %v338 = vld [vmem:[%s299 + $0x98] sm:$0xff]
      %v339 = vld [vmem:[%s299 + $0xa0] sm:$0xff]
      %v340 = vld [vmem:[%s299 + $0xa8] sm:$0xff]
      %v341 = vld [vmem:[%s299 + $0xb0] sm:$0xff]
      %v342 = vld [vmem:[%s299 + $0xb8] sm:$0xff]
      %v343 = vld [vmem:[%s299 + $0xc0] sm:$0xff]
      %v344 = vld [vmem:[%s299 + $0xc8] sm:$0xff]
      %v345 = vld [vmem:[%s299 + $0xd0] sm:$0xff]
      %v346 = vld [vmem:[%s299 + $0xd8] sm:$0xff]
      %v347 = vld [vmem:[%s299 + $0xe0] sm:$0xff]
      %v348 = vld [vmem:[%s299 + $0xe8] sm:$0xff]
      %v349 = vld [vmem:[%s299 + $0xf0] sm:$0xff]
      %v350 = vld [vmem:[%s299 + $0xf8] sm:$0xff]
      %v351 = vld [vmem:[%s299 + $0x100] sm:$0xff]
      %v352 = vld [vmem:[%s299 + $0x108] sm:$0xff]
      %v353 = vld [vmem:[%s299 + $0x110] sm:$0xff]
      %v354 = vld [vmem:[%s299 + $0x118] sm:$0xff]
      %v355 = vld [vmem:[%s299 + $0x120] sm:$0xff]
      %v356 = vld [vmem:[%s299 + $0x128] sm:$0xff]
      %v357 = vld [vmem:[%s299 + $0x130] sm:$0xff]
      %v358 = vld [vmem:[%s299 + $0x138] sm:$0xff]
      %v359 = vld [vmem:[%s299 + $0x140] sm:$0xff]
      %v360 = vld [vmem:[%s299 + $0x148] sm:$0xff]
      %v361 = vld [vmem:[%s299 + $0x150] sm:$0xff]
      %v362 = vld [vmem:[%s299 + $0x158] sm:$0xff]
      %v363 = vld [vmem:[%s299 + $0x160] sm:$0xff]
      %v364 = vld [vmem:[%s299 + $0x168] sm:$0xff]
      %v365 = vld [vmem:[%s299 + $0x170] sm:$0xff]
      %v366 = vld [vmem:[%s299 + $0x178] sm:$0xff]
      %v367 = vld [vmem:[%s299 + $0x180] sm:$0xff]
      %v368 = vld [vmem:[%s299 + $0x188] sm:$0xff]
      %v369 = vld [vmem:[%s299 + $0x190] sm:$0xff]
      %v370 = vld [vmem:[%s299 + $0x198] sm:$0xff]
      %v371 = vld [vmem:[%s299 + $0x1a0] sm:$0xff]
      %v372 = vld [vmem:[%s299 + $0x1a8] sm:$0xff]
      %v373 = vld [vmem:[%s299 + $0x1b0] sm:$0xff]
      %v374 = vld [vmem:[%s299 + $0x1b8] sm:$0xff]
      %v375 = vld [vmem:[%s299 + $0x1c0] sm:$0xff]
      %v376 = vld [vmem:[%s299 + $0x1c8] sm:$0xff]
      %v377 = vld [vmem:[%s299 + $0x1d0] sm:$0xff]
      %v378 = vld [vmem:[%s299 + $0x1d8] sm:$0xff]
      %v379 = vld [vmem:[%s299 + $0x1e0] sm:$0xff]
      %v380 = vld [vmem:[%s299 + $0x1e8] sm:$0xff]
      %v381 = vld [vmem:[%s299 + $0x1f0] sm:$0xff]
      %v382 = vld [vmem:[%s299 + $0x1f8] sm:$0xff]
      %v383 = vld [vmem:[%s299 + $0x200] sm:$0xff]
      %v384 = vld [vmem:[%s299 + $0x208] sm:$0xff]
      %v385 = vld [vmem:[%s299 + $0x210] sm:$0xff]
      %v386 = vld [vmem:[%s299 + $0x218] sm:$0xff]
      %v387 = vld [vmem:[%s299 + $0x220] sm:$0xff]
      %v388 = vld [vmem:[%s299 + $0x228] sm:$0xff]
      %v389 = vld [vmem:[%s299 + $0x230] sm:$0xff]
      %v390 = vld [vmem:[%s299 + $0x238] sm:$0xff]
      %v391 = vld [vmem:[%s299 + $0x240] sm:$0xff]
      %v392 = vld [vmem:[%s299 + $0x248] sm:$0xff]
      %v393 = vld [vmem:[%s299 + $0x250] sm:$0xff]
      %v394 = vld [vmem:[%s299 + $0x258] sm:$0xff]
      %v395 = vld [vmem:[%s299 + $0x260] sm:$0xff]
      %v396 = vld [vmem:[%s299 + $0x268] sm:$0xff]
      %v397 = vld [vmem:[%s299 + $0x270] sm:$0xff]
      %v398 = vld [vmem:[%s299 + $0x278] sm:$0xff]
      %v399 = vld [vmem:[%s299 + $0x280] sm:$0xff]
      %v400 = vld [vmem:[%s299 + $0x288] sm:$0xff]
      %v401 = vld [vmem:[%s299 + $0x290] sm:$0xff]
      %v402 = vld [vmem:[%s299 + $0x298] sm:$0xff]
      %v403 = vld [vmem:[%s299 + $0x2a0] sm:$0xff]
      %v404 = vld [vmem:[%s299 + $0x2a8] sm:$0xff]
      %v405 = vld [vmem:[%s299 + $0x2b0] sm:$0xff]
      %v406 = vld [vmem:[%s299 + $0x2b8] sm:$0xff]
      %v407 = vld [vmem:[%s299 + $0x2c0] sm:$0xff]
      %v408 = vld [vmem:[%s299 + $0x2c8] sm:$0xff]
      %v409 = vld [vmem:[%s299 + $0x2d0] sm:$0xff]
      %v410 = vld [vmem:[%s299 + $0x2d8] sm:$0xff]
      %v411 = vld [vmem:[%s299 + $0x2e0] sm:$0xff]
      %v412 = vld [vmem:[%s299 + $0x2e8] sm:$0xff]
      %v413 = vld [vmem:[%s299 + $0x2f0] sm:$0xff]
      %v414 = vld [vmem:[%s299 + $0x2f8] sm:$0xff]
      %v415 = vld [vmem:[%s299 + $0x300] sm:$0xff]
      %v416 = vld [vmem:[%s299 + $0x308] sm:$0xff]
      %v417 = vld [vmem:[%s299 + $0x310] sm:$0xff]
      %v418 = vld [vmem:[%s299 + $0x318] sm:$0xff]
      %v419 = vld [vmem:[%s299 + $0x320] sm:$0xff]
      %v420 = vld [vmem:[%s299 + $0x328] sm:$0xff]
      %v421 = vld [vmem:[%s299 + $0x330] sm:$0xff]
      %v422 = vld [vmem:[%s299 + $0x338] sm:$0xff]
      %v423 = vld [vmem:[%s299 + $0x340] sm:$0xff]
      %v424 = vld [vmem:[%s299 + $0x348] sm:$0xff]
      %v425 = vld [vmem:[%s299 + $0x350] sm:$0xff]
      %v426 = vld [vmem:[%s299 + $0x358] sm:$0xff]
      %v427 = vld [vmem:[%s299 + $0x360] sm:$0xff]
      %v428 = vld [vmem:[%s299 + $0x368] sm:$0xff]
      %v429 = vld [vmem:[%s299 + $0x370] sm:$0xff]
      %v430 = vld [vmem:[%s299 + $0x378] sm:$0xff]
      %v431 = vld [vmem:[%s299 + $0x380] sm:$0xff]
      %v432 = vld [vmem:[%s299 + $0x388] sm:$0xff]
      %v433 = vld [vmem:[%s299 + $0x390] sm:$0xff]
      %v434 = vld [vmem:[%s299 + $0x398] sm:$0xff]
      %v435 = vld [vmem:[%s299 + $0x3a0] sm:$0xff]
      %v436 = vld [vmem:[%s299 + $0x3a8] sm:$0xff]
      %v437 = vld [vmem:[%s299 + $0x3b0] sm:$0xff]
      %v438 = vld [vmem:[%s299 + $0x3b8] sm:$0xff]
      %v439 = vld [vmem:[%s299 + $0x3c0] sm:$0xff]
      %v440 = vld [vmem:[%s299 + $0x3c8] sm:$0xff]
      %v441 = vld [vmem:[%s299 + $0x3d0] sm:$0xff]
      %v442 = vld [vmem:[%s299 + $0x3d8] sm:$0xff]
      %v443 = vld [vmem:[%s299 + $0x3e0] sm:$0xff]
      %v444 = vld [vmem:[%s299 + $0x3e8] sm:$0xff]
      %v445 = vld [vmem:[%s299 + $0x3f0] sm:$0xff]
      %v446 = vld [vmem:[%s299 + $0x3f8] sm:$0xff]
      %v449 = vunpack.c.l.b16 %v317
      %v450 = vunpack.c.h.b16 %v317
      %v451 = vunpack.c.l.b16 %v318
      %v452 = vunpack.c.h.b16 %v318
      %v453 = vpack.c.b16 %v449, %v449
      %v454 = vpack.c.b16 %v450, %v450
      %v455 = vpack.c.b16 %v451, %v451
      %v456 = vpack.c.b16 %v452, %v452
      %v589 = vunpack.c.l.b16 %v319
      %v590 = vunpack.c.h.b16 %v319
      %v591 = vunpack.c.l.b16 %v320
      %v592 = vunpack.c.h.b16 %v320
      %v593 = vunpack.c.l.b16 %v321
      %v594 = vunpack.c.h.b16 %v321
      %v595 = vunpack.c.l.b16 %v322
      %v596 = vunpack.c.h.b16 %v322
      %v597 = vunpack.c.l.b16 %v323
      %v598 = vunpack.c.h.b16 %v323
      %v599 = vunpack.c.l.b16 %v324
      %v600 = vunpack.c.h.b16 %v324
      %v601 = vunpack.c.l.b16 %v325
      %v602 = vunpack.c.h.b16 %v325
      %v603 = vunpack.c.l.b16 %v326
      %v604 = vunpack.c.h.b16 %v326
      %v605 = vunpack.c.l.b16 %v327
      %v606 = vunpack.c.h.b16 %v327
      %v607 = vunpack.c.l.b16 %v328
      %v608 = vunpack.c.h.b16 %v328
      %v609 = vunpack.c.l.b16 %v329
      %v610 = vunpack.c.h.b16 %v329
      %v611 = vunpack.c.l.b16 %v330
      %v612 = vunpack.c.h.b16 %v330
      %v613 = vunpack.c.l.b16 %v331
      %v614 = vunpack.c.h.b16 %v331
      %v615 = vunpack.c.l.b16 %v332
      %v616 = vunpack.c.h.b16 %v332
      %v617 = vunpack.c.l.b16 %v333
      %v618 = vunpack.c.h.b16 %v333
      %v619 = vunpack.c.l.b16 %v334
      %v620 = vunpack.c.h.b16 %v334
      %v621 = vunpack.c.l.b16 %v335
      %v622 = vunpack.c.h.b16 %v335
      %v623 = vunpack.c.l.b16 %v336
      %v624 = vunpack.c.h.b16 %v336
      %v625 = vunpack.c.l.b16 %v337
      %v626 = vunpack.c.h.b16 %v337
      %v627 = vunpack.c.l.b16 %v338
      %v628 = vunpack.c.h.b16 %v338
      %v629 = vunpack.c.l.b16 %v339
      %v630 = vunpack.c.h.b16 %v339
      %v631 = vunpack.c.l.b16 %v340
      %v632 = vunpack.c.h.b16 %v340
      %v633 = vunpack.c.l.b16 %v341
      %v634 = vunpack.c.h.b16 %v341
      %v635 = vunpack.c.l.b16 %v342
      %v636 = vunpack.c.h.b16 %v342
      %v637 = vunpack.c.l.b16 %v343
      %v638 = vunpack.c.h.b16 %v343
      %v639 = vunpack.c.l.b16 %v344
      %v640 = vunpack.c.h.b16 %v344
      %v641 = vunpack.c.l.b16 %v345
      %v642 = vunpack.c.h.b16 %v345
      %v643 = vunpack.c.l.b16 %v346
      %v644 = vunpack.c.h.b16 %v346
      %v645 = vunpack.c.l.b16 %v347
      %v646 = vunpack.c.h.b16 %v347
      %v647 = vunpack.c.l.b16 %v348
      %v648 = vunpack.c.h.b16 %v348
      %v649 = vunpack.c.l.b16 %v349
      %v650 = vunpack.c.h.b16 %v349
      %v651 = vunpack.c.l.b16 %v350
      %v652 = vunpack.c.h.b16 %v350
      %v653 = vunpack.c.l.b16 %v351
      %v654 = vunpack.c.h.b16 %v351
      %v655 = vunpack.c.l.b16 %v352
      %v656 = vunpack.c.h.b16 %v352
      %v657 = vunpack.c.l.b16 %v353
      %v658 = vunpack.c.h.b16 %v353
      %v659 = vunpack.c.l.b16 %v354
      %v660 = vunpack.c.h.b16 %v354
      %v661 = vunpack.c.l.b16 %v355
      %v662 = vunpack.c.h.b16 %v355
      %v663 = vunpack.c.l.b16 %v356
      %v664 = vunpack.c.h.b16 %v356
      %v665 = vunpack.c.l.b16 %v357
      %v666 = vunpack.c.h.b16 %v357
      %v667 = vunpack.c.l.b16 %v358
      %v668 = vunpack.c.h.b16 %v358
      %v669 = vunpack.c.l.b16 %v359
      %v670 = vunpack.c.h.b16 %v359
      %v671 = vunpack.c.l.b16 %v360
      %v672 = vunpack.c.h.b16 %v360
      %v673 = vunpack.c.l.b16 %v361
      %v674 = vunpack.c.h.b16 %v361
      %v675 = vunpack.c.l.b16 %v362
      %v676 = vunpack.c.h.b16 %v362
      %v677 = vunpack.c.l.b16 %v363
      %v678 = vunpack.c.h.b16 %v363
      %v679 = vunpack.c.l.b16 %v364
      %v680 = vunpack.c.h.b16 %v364
      %v681 = vunpack.c.l.b16 %v365
      %v682 = vunpack.c.h.b16 %v365
      %v683 = vunpack.c.l.b16 %v366
      %v684 = vunpack.c.h.b16 %v366
      %v685 = vunpack.c.l.b16 %v367
      %v686 = vunpack.c.h.b16 %v367
      %v687 = vunpack.c.l.b16 %v368
      %v688 = vunpack.c.h.b16 %v368
      %v689 = vunpack.c.l.b16 %v369
      %v690 = vunpack.c.h.b16 %v369
      %v691 = vunpack.c.l.b16 %v370
      %v692 = vunpack.c.h.b16 %v370
      %v693 = vunpack.c.l.b16 %v371
      %v694 = vunpack.c.h.b16 %v371
      %v695 = vunpack.c.l.b16 %v372
      %v696 = vunpack.c.h.b16 %v372
      %v697 = vunpack.c.l.b16 %v373
      %v698 = vunpack.c.h.b16 %v373
      %v699 = vunpack.c.l.b16 %v374
      %v700 = vunpack.c.h.b16 %v374
      %v701 = vunpack.c.l.b16 %v375
      %v702 = vunpack.c.h.b16 %v375
      %v703 = vunpack.c.l.b16 %v376
      %v704 = vunpack.c.h.b16 %v376
      %v705 = vunpack.c.l.b16 %v377
      %v706 = vunpack.c.h.b16 %v377
      %v707 = vunpack.c.l.b16 %v378
      %v708 = vunpack.c.h.b16 %v378
      %v709 = vunpack.c.l.b16 %v379
      %v710 = vunpack.c.h.b16 %v379
      %v711 = vunpack.c.l.b16 %v380
      %v712 = vunpack.c.h.b16 %v380
      %v713 = vunpack.c.l.b16 %v381
      %v714 = vunpack.c.h.b16 %v381
      %v715 = vunpack.c.l.b16 %v382
      %v716 = vunpack.c.h.b16 %v382
      %v717 = vunpack.c.l.b16 %v383
      %v718 = vunpack.c.h.b16 %v383
      %v719 = vunpack.c.l.b16 %v384
      %v720 = vunpack.c.h.b16 %v384
      %v721 = vunpack.c.l.b16 %v385
      %v722 = vunpack.c.h.b16 %v385
      %v723 = vunpack.c.l.b16 %v386
      %v724 = vunpack.c.h.b16 %v386
      %v725 = vunpack.c.l.b16 %v387
      %v726 = vunpack.c.h.b16 %v387
      %v727 = vunpack.c.l.b16 %v388
      %v728 = vunpack.c.h.b16 %v388
      %v729 = vunpack.c.l.b16 %v389
      %v730 = vunpack.c.h.b16 %v389
      %v731 = vunpack.c.l.b16 %v390
      %v732 = vunpack.c.h.b16 %v390
      %v733 = vunpack.c.l.b16 %v391
      %v734 = vunpack.c.h.b16 %v391
      %v735 = vunpack.c.l.b16 %v392
      %v736 = vunpack.c.h.b16 %v392
      %v737 = vunpack.c.l.b16 %v393
      %v738 = vunpack.c.h.b16 %v393
      %v739 = vunpack.c.l.b16 %v394
      %v740 = vunpack.c.h.b16 %v394
      %v741 = vunpack.c.l.b16 %v395
      %v742 = vunpack.c.h.b16 %v395
      %v743 = vunpack.c.l.b16 %v396
      %v744 = vunpack.c.h.b16 %v396
      %v745 = vunpack.c.l.b16 %v397
      %v746 = vunpack.c.h.b16 %v397
      %v747 = vunpack.c.l.b16 %v398
      %v748 = vunpack.c.h.b16 %v398
      %v749 = vunpack.c.l.b16 %v399
      %v750 = vunpack.c.h.b16 %v399
      %v751 = vunpack.c.l.b16 %v400
      %v752 = vunpack.c.h.b16 %v400
      %v753 = vunpack.c.l.b16 %v401
      %v754 = vunpack.c.h.b16 %v401
      %v755 = vunpack.c.l.b16 %v402
      %v756 = vunpack.c.h.b16 %v402
      %v757 = vunpack.c.l.b16 %v403
      %v758 = vunpack.c.h.b16 %v403
      %v759 = vunpack.c.l.b16 %v404
      %v760 = vunpack.c.h.b16 %v404
      %v761 = vunpack.c.l.b16 %v405
      %v762 = vunpack.c.h.b16 %v405
      %v763 = vunpack.c.l.b16 %v406
      %v764 = vunpack.c.h.b16 %v406
      %v765 = vunpack.c.l.b16 %v407
      %v766 = vunpack.c.h.b16 %v407
      %v767 = vunpack.c.l.b16 %v408
      %v768 = vunpack.c.h.b16 %v408
      %v769 = vunpack.c.l.b16 %v409
      %v770 = vunpack.c.h.b16 %v409
      %v771 = vunpack.c.l.b16 %v410
      %v772 = vunpack.c.h.b16 %v410
      %v773 = vunpack.c.l.b16 %v411
      %v774 = vunpack.c.h.b16 %v411
      %v775 = vunpack.c.l.b16 %v412
      %v776 = vunpack.c.h.b16 %v412
      %v777 = vunpack.c.l.b16 %v413
      %v778 = vunpack.c.h.b16 %v413
      %v779 = vunpack.c.l.b16 %v414
      %v780 = vunpack.c.h.b16 %v414
      %v781 = vunpack.c.l.b16 %v415
      %v782 = vunpack.c.h.b16 %v415
      %v783 = vunpack.c.l.b16 %v416
      %v784 = vunpack.c.h.b16 %v416
      %v785 = vunpack.c.l.b16 %v417
      %v786 = vunpack.c.h.b16 %v417
      %v787 = vunpack.c.l.b16 %v418
      %v788 = vunpack.c.h.b16 %v418
      %v789 = vunpack.c.l.b16 %v419
      %v790 = vunpack.c.h.b16 %v419
      %v791 = vunpack.c.l.b16 %v420
      %v792 = vunpack.c.h.b16 %v420
      %v793 = vunpack.c.l.b16 %v421
      %v794 = vunpack.c.h.b16 %v421
      %v795 = vunpack.c.l.b16 %v422
      %v796 = vunpack.c.h.b16 %v422
      %v797 = vunpack.c.l.b16 %v423
      %v798 = vunpack.c.h.b16 %v423
      %v799 = vunpack.c.l.b16 %v424
      %v800 = vunpack.c.h.b16 %v424
      %v801 = vunpack.c.l.b16 %v425
      %v802 = vunpack.c.h.b16 %v425
      %v803 = vunpack.c.l.b16 %v426
      %v804 = vunpack.c.h.b16 %v426
      %v805 = vunpack.c.l.b16 %v427
      %v806 = vunpack.c.h.b16 %v427
      %v807 = vunpack.c.l.b16 %v428
      %v808 = vunpack.c.h.b16 %v428
      %v809 = vunpack.c.l.b16 %v429
      %v810 = vunpack.c.h.b16 %v429
      %v811 = vunpack.c.l.b16 %v430
      %v812 = vunpack.c.h.b16 %v430
      %v813 = vunpack.c.l.b16 %v431
      %v814 = vunpack.c.h.b16 %v431
      %v815 = vunpack.c.l.b16 %v432
      %v816 = vunpack.c.h.b16 %v432
      %v817 = vunpack.c.l.b16 %v433
      %v818 = vunpack.c.h.b16 %v433
      %v819 = vunpack.c.l.b16 %v434
      %v820 = vunpack.c.h.b16 %v434
      %v821 = vunpack.c.l.b16 %v435
      %v822 = vunpack.c.h.b16 %v435
      %v823 = vunpack.c.l.b16 %v436
      %v824 = vunpack.c.h.b16 %v436
      %v825 = vunpack.c.l.b16 %v437
      %v826 = vunpack.c.h.b16 %v437
      %v827 = vunpack.c.l.b16 %v438
      %v828 = vunpack.c.h.b16 %v438
      %v829 = vunpack.c.l.b16 %v439
      %v830 = vunpack.c.h.b16 %v439
      %v831 = vunpack.c.l.b16 %v440
      %v832 = vunpack.c.h.b16 %v440
      %v833 = vunpack.c.l.b16 %v441
      %v834 = vunpack.c.h.b16 %v441
      %v835 = vunpack.c.l.b16 %v442
      %v836 = vunpack.c.h.b16 %v442
      %v837 = vunpack.c.l.b16 %v443
      %v838 = vunpack.c.h.b16 %v443
      %v839 = vunpack.c.l.b16 %v444
      %v840 = vunpack.c.h.b16 %v444
      %v841 = vunpack.c.l.b16 %v445
      %v842 = vunpack.c.h.b16 %v445
      %v843 = vunpack.c.l.b16 %v446
      %v844 = vunpack.c.h.b16 %v446
      %v845 = vpack.c.b16 %v593, %v589
      %v846 = vpack.c.b16 %v594, %v590
      %v847 = vpack.c.b16 %v595, %v591
      %v848 = vpack.c.b16 %v596, %v592
      %v849 = vpack.c.b16 %v601, %v597
      %v850 = vpack.c.b16 %v602, %v598
      %v851 = vpack.c.b16 %v603, %v599
      %v852 = vpack.c.b16 %v604, %v600
      %v853 = vpack.c.b16 %v609, %v605
      %v854 = vpack.c.b16 %v610, %v606
      %v855 = vpack.c.b16 %v611, %v607
      %v856 = vpack.c.b16 %v612, %v608
      %v857 = vpack.c.b16 %v617, %v613
      %v858 = vpack.c.b16 %v618, %v614
      %v859 = vpack.c.b16 %v619, %v615
      %v860 = vpack.c.b16 %v620, %v616
      %v861 = vpack.c.b16 %v625, %v621
      %v862 = vpack.c.b16 %v626, %v622
      %v863 = vpack.c.b16 %v627, %v623
      %v864 = vpack.c.b16 %v628, %v624
      %v865 = vpack.c.b16 %v633, %v629
      %v866 = vpack.c.b16 %v634, %v630
      %v867 = vpack.c.b16 %v635, %v631
      %v868 = vpack.c.b16 %v636, %v632
      %v869 = vpack.c.b16 %v641, %v637
      %v870 = vpack.c.b16 %v642, %v638
      %v871 = vpack.c.b16 %v643, %v639
      %v872 = vpack.c.b16 %v644, %v640
      %v873 = vpack.c.b16 %v649, %v645
      %v874 = vpack.c.b16 %v650, %v646
      %v875 = vpack.c.b16 %v651, %v647
      %v876 = vpack.c.b16 %v652, %v648
      %v877 = vpack.c.b16 %v657, %v653
      %v878 = vpack.c.b16 %v658, %v654
      %v879 = vpack.c.b16 %v659, %v655
      %v880 = vpack.c.b16 %v660, %v656
      %v881 = vpack.c.b16 %v665, %v661
      %v882 = vpack.c.b16 %v666, %v662
      %v883 = vpack.c.b16 %v667, %v663
      %v884 = vpack.c.b16 %v668, %v664
      %v885 = vpack.c.b16 %v673, %v669
      %v886 = vpack.c.b16 %v674, %v670
      %v887 = vpack.c.b16 %v675, %v671
      %v888 = vpack.c.b16 %v676, %v672
      %v889 = vpack.c.b16 %v681, %v677
      %v890 = vpack.c.b16 %v682, %v678
      %v891 = vpack.c.b16 %v683, %v679
      %v892 = vpack.c.b16 %v684, %v680
      %v893 = vpack.c.b16 %v689, %v685
      %v894 = vpack.c.b16 %v690, %v686
      %v895 = vpack.c.b16 %v691, %v687
      %v896 = vpack.c.b16 %v692, %v688
      %v897 = vpack.c.b16 %v697, %v693
      %v898 = vpack.c.b16 %v698, %v694
      %v899 = vpack.c.b16 %v699, %v695
      %v900 = vpack.c.b16 %v700, %v696
      %v901 = vpack.c.b16 %v705, %v701
      %v902 = vpack.c.b16 %v706, %v702
      %v903 = vpack.c.b16 %v707, %v703
      %v904 = vpack.c.b16 %v708, %v704
      %v905 = vpack.c.b16 %v713, %v709
      %v906 = vpack.c.b16 %v714, %v710
      %v907 = vpack.c.b16 %v715, %v711
      %v908 = vpack.c.b16 %v716, %v712
      %v909 = vpack.c.b16 %v721, %v717
      %v910 = vpack.c.b16 %v722, %v718
      %v911 = vpack.c.b16 %v723, %v719
      %v912 = vpack.c.b16 %v724, %v720
      %v913 = vpack.c.b16 %v729, %v725
      %v914 = vpack.c.b16 %v730, %v726
      %v915 = vpack.c.b16 %v731, %v727
      %v916 = vpack.c.b16 %v732, %v728
      %v917 = vpack.c.b16 %v737, %v733
      %v918 = vpack.c.b16 %v738, %v734
      %v919 = vpack.c.b16 %v739, %v735
      %v920 = vpack.c.b16 %v740, %v736
      %v921 = vpack.c.b16 %v745, %v741
      %v922 = vpack.c.b16 %v746, %v742
      %v923 = vpack.c.b16 %v747, %v743
      %v924 = vpack.c.b16 %v748, %v744
      %v925 = vpack.c.b16 %v753, %v749
      %v926 = vpack.c.b16 %v754, %v750
      %v927 = vpack.c.b16 %v755, %v751
      %v928 = vpack.c.b16 %v756, %v752
      %v929 = vpack.c.b16 %v761, %v757
      %v930 = vpack.c.b16 %v762, %v758
      %v931 = vpack.c.b16 %v763, %v759
      %v932 = vpack.c.b16 %v764, %v760
      %v933 = vpack.c.b16 %v769, %v765
      %v934 = vpack.c.b16 %v770, %v766
      %v935 = vpack.c.b16 %v771, %v767
      %v936 = vpack.c.b16 %v772, %v768
      %v937 = vpack.c.b16 %v777, %v773
      %v938 = vpack.c.b16 %v778, %v774
      %v939 = vpack.c.b16 %v779, %v775
      %v940 = vpack.c.b16 %v780, %v776
      %v941 = vpack.c.b16 %v785, %v781
      %v942 = vpack.c.b16 %v786, %v782
      %v943 = vpack.c.b16 %v787, %v783
      %v944 = vpack.c.b16 %v788, %v784
      %v945 = vpack.c.b16 %v793, %v789
      %v946 = vpack.c.b16 %v794, %v790
      %v947 = vpack.c.b16 %v795, %v791
      %v948 = vpack.c.b16 %v796, %v792
      %v949 = vpack.c.b16 %v801, %v797
      %v950 = vpack.c.b16 %v802, %v798
      %v951 = vpack.c.b16 %v803, %v799
      %v952 = vpack.c.b16 %v804, %v800
      %v953 = vpack.c.b16 %v809, %v805
      %v954 = vpack.c.b16 %v810, %v806
      %v955 = vpack.c.b16 %v811, %v807
      %v956 = vpack.c.b16 %v812, %v808
      %v957 = vpack.c.b16 %v817, %v813
      %v958 = vpack.c.b16 %v818, %v814
      %v959 = vpack.c.b16 %v819, %v815
      %v960 = vpack.c.b16 %v820, %v816
      %v961 = vpack.c.b16 %v825, %v821
      %v962 = vpack.c.b16 %v826, %v822
      %v963 = vpack.c.b16 %v827, %v823
      %v964 = vpack.c.b16 %v828, %v824
      %v965 = vpack.c.b16 %v833, %v829
      %v966 = vpack.c.b16 %v834, %v830
      %v967 = vpack.c.b16 %v835, %v831
      %v968 = vpack.c.b16 %v836, %v832
      %v969 = vpack.c.b16 %v841, %v837
      %v970 = vpack.c.b16 %v842, %v838
      %v971 = vpack.c.b16 %v843, %v839
      %v972 = vpack.c.b16 %v844, %v840
      %1101 = vmatprep.subr.bf16.mxu0 %v846
      %1102 = vmatpush1.bf16.msra.mxu0 %v845
      %1103 = vmatprep.subr.bf16.mxu0 %v850
      %1104 = vmatpush1.bf16.msra.mxu0 %v849
      %1105 = vmatprep.subr.bf16.mxu0 %v854
      %1106 = vmatpush1.bf16.msra.mxu0 %v853
      %1107 = vmatprep.subr.bf16.mxu0 %v858
      %1108 = vmatpush1.bf16.msra.mxu0 %v857
      %1109 = vmatprep.subr.bf16.mxu0 %v862
      %1110 = vmatpush1.bf16.msra.mxu0 %v861
      %1111 = vmatprep.subr.bf16.mxu0 %v866
      %1112 = vmatpush1.bf16.msra.mxu0 %v865
      %1113 = vmatprep.subr.bf16.mxu0 %v870
      %1114 = vmatpush1.bf16.msra.mxu0 %v869
      %1115 = vmatprep.subr.bf16.mxu0 %v874
      %1116 = vmatpush1.bf16.msra.mxu0 %v873
      %1117 = vmatprep.subr.bf16.mxu0 %v878
      %1118 = vmatpush1.bf16.msra.mxu0 %v877
      %1119 = vmatprep.subr.bf16.mxu0 %v882
      %1120 = vmatpush1.bf16.msra.mxu0 %v881
      %1121 = vmatprep.subr.bf16.mxu0 %v886
      %1122 = vmatpush1.bf16.msra.mxu0 %v885
      %1123 = vmatprep.subr.bf16.mxu0 %v890
      %1124 = vmatpush1.bf16.msra.mxu0 %v889
      %1125 = vmatprep.subr.bf16.mxu0 %v894
      %1126 = vmatpush1.bf16.msra.mxu0 %v893
      %1127 = vmatprep.subr.bf16.mxu0 %v898
      %1128 = vmatpush1.bf16.msra.mxu0 %v897
      %1129 = vmatprep.subr.bf16.mxu0 %v902
      %1130 = vmatpush1.bf16.msra.mxu0 %v901
      %1131 = vmatprep.subr.bf16.mxu0 %v906
      %1132 = vmatpush1.bf16.msra.mxu0 %v905
      %1133 = vmatprep.mubr.bf16.mxu0 %v454
      %1134 = vmatmul.mubr.bf16.gmra.mrb[0].mxu0 %v453
      %v1135 = vpop.f32.mrb[0].mxu0
      %v1136 = vadd.f32 0.0, %v1135
      %v1137 = vpop.f32.mrb[0].mxu0
      %v1138 = vadd.f32 0.0, %v1137
      %v1139 = vpop.f32.mrb[0].mxu0
      %v1140 = vpop.f32.mrb[0].mxu0
      %1141 = vdwg.mxu0
      %1142 = vmatprep.subr.bf16.mxu0 %v910
      %1143 = vmatpush1.bf16.msra.mxu0 %v909
      %1144 = vmatprep.subr.bf16.mxu0 %v914
      %1145 = vmatpush1.bf16.msra.mxu0 %v913
      %1146 = vmatprep.subr.bf16.mxu0 %v918
      %1147 = vmatpush1.bf16.msra.mxu0 %v917
      %1148 = vmatprep.subr.bf16.mxu0 %v922
      %1149 = vmatpush1.bf16.msra.mxu0 %v921
      %1150 = vmatprep.subr.bf16.mxu0 %v926
      %1151 = vmatpush1.bf16.msra.mxu0 %v925
      %1152 = vmatprep.subr.bf16.mxu0 %v930
      %1153 = vmatpush1.bf16.msra.mxu0 %v929
      %1154 = vmatprep.subr.bf16.mxu0 %v934
      %1155 = vmatpush1.bf16.msra.mxu0 %v933
      %1156 = vmatprep.subr.bf16.mxu0 %v938
      %1157 = vmatpush1.bf16.msra.mxu0 %v937
      %1158 = vmatprep.subr.bf16.mxu0 %v942
      %1159 = vmatpush1.bf16.msra.mxu0 %v941
      %1160 = vmatprep.subr.bf16.mxu0 %v946
      %1161 = vmatpush1.bf16.msra.mxu0 %v945
      %1162 = vmatprep.subr.bf16.mxu0 %v950
      %1163 = vmatpush1.bf16.msra.mxu0 %v949
      %1164 = vmatprep.subr.bf16.mxu0 %v954
      %1165 = vmatpush1.bf16.msra.mxu0 %v953
      %1166 = vmatprep.subr.bf16.mxu0 %v958
      %1167 = vmatpush1.bf16.msra.mxu0 %v957
      %1168 = vmatprep.subr.bf16.mxu0 %v962
      %1169 = vmatpush1.bf16.msra.mxu0 %v961
      %1170 = vmatprep.subr.bf16.mxu0 %v966
      %1171 = vmatpush1.bf16.msra.mxu0 %v965
      %1172 = vmatprep.subr.bf16.mxu0 %v970
      %1173 = vmatpush1.bf16.msra.mxu0 %v969
      %1174 = vmatprep.mubr.bf16.mxu0 %v456
      %1175 = vmatmul.mubr.bf16.gmra.mrb[0].mxu0 %v455
      %v1176 = vpop.f32.mrb[0].mxu0
      %v1177 = vadd.f32 %v1136, %v1176
      %v1178 = vpop.f32.mrb[0].mxu0
      %v1179 = vadd.f32 %v1138, %v1178
      %v1180 = vpop.f32.mrb[0].mxu0
      %v1181 = vpop.f32.mrb[0].mxu0
      %1182 = vdwg.mxu0
      %1183 = vmatprep.subr.bf16.mxu0 %v848
      %1184 = vmatpush1.bf16.msra.mxu0 %v847
      %1185 = vmatprep.subr.bf16.mxu0 %v852
      %1186 = vmatpush1.bf16.msra.mxu0 %v851
      %1187 = vmatprep.subr.bf16.mxu0 %v856
      %1188 = vmatpush1.bf16.msra.mxu0 %v855
      %1189 = vmatprep.subr.bf16.mxu0 %v860
      %1190 = vmatpush1.bf16.msra.mxu0 %v859
      %1191 = vmatprep.subr.bf16.mxu0 %v864
      %1192 = vmatpush1.bf16.msra.mxu0 %v863
      %1193 = vmatprep.subr.bf16.mxu0 %v868
      %1194 = vmatpush1.bf16.msra.mxu0 %v867
      %1195 = vmatprep.subr.bf16.mxu0 %v872
      %1196 = vmatpush1.bf16.msra.mxu0 %v871
      %1197 = vmatprep.subr.bf16.mxu0 %v876
      %1198 = vmatpush1.bf16.msra.mxu0 %v875
      %1199 = vmatprep.subr.bf16.mxu0 %v880
      %1200 = vmatpush1.bf16.msra.mxu0 %v879
      %1201 = vmatprep.subr.bf16.mxu0 %v884
      %1202 = vmatpush1.bf16.msra.mxu0 %v883
      %1203 = vmatprep.subr.bf16.mxu0 %v888
      %1204 = vmatpush1.bf16.msra.mxu0 %v887
      %1205 = vmatprep.subr.bf16.mxu0 %v892
      %1206 = vmatpush1.bf16.msra.mxu0 %v891
      %1207 = vmatprep.subr.bf16.mxu0 %v896
      %1208 = vmatpush1.bf16.msra.mxu0 %v895
      %1209 = vmatprep.subr.bf16.mxu0 %v900
      %1210 = vmatpush1.bf16.msra.mxu0 %v899
      %1211 = vmatprep.subr.bf16.mxu0 %v904
      %1212 = vmatpush1.bf16.msra.mxu0 %v903
      %1213 = vmatprep.subr.bf16.mxu0 %v908
      %1214 = vmatpush1.bf16.msra.mxu0 %v907
      %1215 = vmatprep.mubr.bf16.mxu0 %v454
      %1216 = vmatmul.mubr.bf16.gmra.mrb[0].mxu0 %v453
      %v1217 = vpop.f32.mrb[0].mxu0
      %v1218 = vadd.f32 0.0, %v1217
      %v1219 = vpop.f32.mrb[0].mxu0
      %v1220 = vadd.f32 0.0, %v1219
      %v1221 = vpop.f32.mrb[0].mxu0
      %v1222 = vpop.f32.mrb[0].mxu0
      %1223 = vdwg.mxu0
      %1224 = vmatprep.subr.bf16.mxu0 %v912
      %1225 = vmatpush1.bf16.msra.mxu0 %v911
      %1226 = vmatprep.subr.bf16.mxu0 %v916
      %1227 = vmatpush1.bf16.msra.mxu0 %v915
      %1228 = vmatprep.subr.bf16.mxu0 %v920
      %1229 = vmatpush1.bf16.msra.mxu0 %v919
      %1230 = vmatprep.subr.bf16.mxu0 %v924
      %1231 = vmatpush1.bf16.msra.mxu0 %v923
      %1232 = vmatprep.subr.bf16.mxu0 %v928
      %1233 = vmatpush1.bf16.msra.mxu0 %v927
      %1234 = vmatprep.subr.bf16.mxu0 %v932
      %1235 = vmatpush1.bf16.msra.mxu0 %v931
      %1236 = vmatprep.subr.bf16.mxu0 %v936
      %1237 = vmatpush1.bf16.msra.mxu0 %v935
      %1238 = vmatprep.subr.bf16.mxu0 %v940
      %1239 = vmatpush1.bf16.msra.mxu0 %v939
      %1240 = vmatprep.subr.bf16.mxu0 %v944
      %1241 = vmatpush1.bf16.msra.mxu0 %v943
      %1242 = vmatprep.subr.bf16.mxu0 %v948
      %1243 = vmatpush1.bf16.msra.mxu0 %v947
      %1244 = vmatprep.subr.bf16.mxu0 %v952
      %1245 = vmatpush1.bf16.msra.mxu0 %v951
      %1246 = vmatprep.subr.bf16.mxu0 %v956
      %1247 = vmatpush1.bf16.msra.mxu0 %v955
      %1248 = vmatprep.subr.bf16.mxu0 %v960
      %1249 = vmatpush1.bf16.msra.mxu0 %v959
      %1250 = vmatprep.subr.bf16.mxu0 %v964
      %1251 = vmatpush1.bf16.msra.mxu0 %v963
      %1252 = vmatprep.subr.bf16.mxu0 %v968
      %1253 = vmatpush1.bf16.msra.mxu0 %v967
      %1254 = vmatprep.subr.bf16.mxu0 %v972
      %1255 = vmatpush1.bf16.msra.mxu0 %v971
      %1256 = vmatprep.mubr.bf16.mxu0 %v456
      %1257 = vmatmul.mubr.bf16.gmra.mrb[0].mxu0 %v455
      %v1258 = vpop.f32.mrb[0].mxu0
      %v1259 = vadd.f32 %v1218, %v1258
      %v1260 = vpop.f32.mrb[0].mxu0
      %v1261 = vadd.f32 %v1220, %v1260
      %v1262 = vpop.f32.mrb[0].mxu0
      %v1263 = vpop.f32.mrb[0].mxu0
      %1264 = vdwg.mxu0
      %v1265 = vadd.f32 %v313, %v1177
      %v1266 = vadd.f32 %v314, %v1179
      %v1267 = vadd.f32 %v315, %v1259
      %v1268 = vadd.f32 %v316, %v1261
      %1269 = vst [vmem:[#allocation2] sm:$0xff] %v1265
      %1270 = vst [vmem:[#allocation2 + $0x8] sm:$0xff] %v1266
      %1271 = vst [vmem:[#allocation2 + $0x10] sm:$0xff] %v1267
      %1272 = vst [vmem:[#allocation2 + $0x18] sm:$0xff] %v1268
      %p1273 = scmp.eq.s32.totalorder %s24, 3
      // Predicated region
      $region49: #{discriminator_forward.5} parent=43 // pred_check
        %p1274 = pneg %p1273
      $region50: #{discriminator_forward.5} parent=43 // pred_check_branch
        %1276 = sbr.rel (%p1274) target = $region52
      $region51: #{discriminator_forward.5} parent=43 // pred_region
        %v1277 = vld [vmem:[#allocation2] sm:$0xff]
        %v1278 = vld [vmem:[#allocation2 + $0x8] sm:$0xff]
        %v1279 = vld [vmem:[#allocation2 + $0x10] sm:$0xff]
        %v1280 = vld [vmem:[#allocation2 + $0x18] sm:$0xff]
        %v1281 = vld [vmem:[%s2] sm:$0xf]
        %v1283 = vlaneseq
        %v1284 = vshrl.u32 %v1283, 7
        %v1285 = vsub.s32 0, %v1284
        %v1286 = vrot.slane %v1281, %v1285
        %v1287 = vlaneseq
        %v1288 = vshrl.u32 %v1287, 7
        %v1289 = vsub.s32 1, %v1288
        %v1290 = vrot.slane %v1281, %v1289
        %v1291 = vlaneseq
        %v1292 = vshrl.u32 %v1291, 7
        %v1293 = vsub.s32 2, %v1292
        %v1294 = vrot.slane %v1281, %v1293
        %v1295 = vlaneseq
        %v1296 = vshrl.u32 %v1295, 7
        %v1297 = vsub.s32 3, %v1296
        %v1298 = vrot.slane %v1281, %v1297
        %v1303 = vmul.f32 %v1277, %v1286
        %v1304 = vmul.f32 %v1278, %v1290
        %v1305 = vmul.f32 %v1279, %v1294
        %v1306 = vmul.f32 %v1280, %v1298
        %v1307 = vld [vmem:[%s3] sm:$0xf]
        %v1309 = vlaneseq
        %v1310 = vshrl.u32 %v1309, 7
        %v1311 = vsub.s32 0, %v1310
        %v1312 = vrot.slane %v1307, %v1311
        %v1313 = vlaneseq
        %v1314 = vshrl.u32 %v1313, 7
        %v1315 = vsub.s32 1, %v1314
        %v1316 = vrot.slane %v1307, %v1315
        %v1317 = vlaneseq
        %v1318 = vshrl.u32 %v1317, 7
        %v1319 = vsub.s32 2, %v1318
        %v1320 = vrot.slane %v1307, %v1319
        %v1321 = vlaneseq
        %v1322 = vshrl.u32 %v1321, 7
        %v1323 = vsub.s32 3, %v1322
        %v1324 = vrot.slane %v1307, %v1323
        %v1329 = vadd.f32 %v1303, %v1312
        %v1330 = vadd.f32 %v1304, %v1316
        %v1331 = vadd.f32 %v1305, %v1320
        %v1332 = vadd.f32 %v1306, %v1324
        %vm1333 = vcmp.ge.f32.partialorder %v1329, 0.0
        %vm1334 = vcmp.ge.f32.partialorder %v1330, 0.0
        %vm1335 = vcmp.ge.f32.partialorder %v1331, 0.0
        %vm1336 = vcmp.ge.f32.partialorder %v1332, 0.0
        %v1337 = vmul.f32 %v1329, 0.01
        %v1338 = vmul.f32 %v1330, 0.01
        %v1339 = vmul.f32 %v1331, 0.01
        %v1340 = vmul.f32 %v1332, 0.01
        %v1341 = vsel %vm1333, %v1329, %v1337
        %v1342 = vsel %vm1334, %v1330, %v1338
        %v1343 = vsel %vm1335, %v1331, %v1339
        %v1344 = vsel %vm1336, %v1332, %v1340
        %v1345 = vld [vmem:[%s4] sm:$0xf]
        %v1347 = vlaneseq
        %v1348 = vshrl.u32 %v1347, 7
        %v1349 = vsub.s32 0, %v1348
        %v1350 = vrot.slane %v1345, %v1349
        %v1351 = vlaneseq
        %v1352 = vshrl.u32 %v1351, 7
        %v1353 = vsub.s32 1, %v1352
        %v1354 = vrot.slane %v1345, %v1353
        %v1355 = vlaneseq
        %v1356 = vshrl.u32 %v1355, 7
        %v1357 = vsub.s32 2, %v1356
        %v1358 = vrot.slane %v1345, %v1357
        %v1359 = vlaneseq
        %v1360 = vshrl.u32 %v1359, 7
        %v1361 = vsub.s32 3, %v1360
        %v1362 = vrot.slane %v1345, %v1361
        %v1367 = vmul.f32 %v1341, %v1350
        %v1368 = vmul.f32 %v1342, %v1354
        %v1369 = vmul.f32 %v1343, %v1358
        %v1370 = vmul.f32 %v1344, %v1362
        %v1371 = vadd.f32 %v1367, %v1368
        %v1372 = vadd.f32 %v1371, %v1369
        %v1373 = vadd.f32 %v1372, %v1370
        %1374 = vadd.xlane.f32.xlu0 %v1373
        %v1375 = vpop.xlane.xlu0 %1374
        %v1376 = vld [vmem:[#allocation3] sm:$0x1]
        %v1378 = vlaneseq
        %v1379 = vshrl.u32 %v1378, 7
        %v1380 = vsub.s32 0, %v1379
        %v1381 = vrot.slane %v1376, %v1380
        %v1383 = vadd.f32 %v1375, %v1381
        %v1384 = vxor.u32 %v1383, 2147483648
        %v1385 = vmul.f32 %v1384, 1.442695
        %v1386 = vpow.pop %v1385
        %v1387 = vadd.f32 %v1386, 1.0
        %v1388 = vrcp.pop %v1387
        %v1389 = vmul.f32 1.0, %v1388
        %vm1390 = vcmask 7168
        %1391 = vst.msk [vmem:[%s304] sm:$0xff] %vm1390, %v1389
      $region52: #{discriminator_forward.5} parent=43 // pred_fallthru
        _
      %p1392 = scmp.lt.s32.totalorder %s23, 0
      %s1393 = scalar_select %p1392, %s23, 0
      %s1394 = smul.addr %s1393, 8
      %s1395 = scalar_lea.vmem %s6, %s1394
      // Predicated region
      $region53: #{discriminator_forward.5} parent=43 // pred_check
        %p1396 = pneg %p187
      $region54: #{discriminator_forward.5} parent=43 // pred_check_branch
        %1398 = sbr.rel (%p1396) target = $region56
      $region55: #{discriminator_forward.5} parent=43 // pred_region
        _
      $region56: #{discriminator_forward.5} parent=43 // pred_fallthru
        _
      // Predicated region
      $region57: #{discriminator_forward.5} parent=43 // pred_check
        %p1399 = pneg %p187
      $region58: #{discriminator_forward.5} parent=43 // pred_check_branch
        %1401 = sbr.rel (%p1399) target = $region60
      $region59: #{discriminator_forward.5} parent=43 // pred_region
        %p1402 = scmp.lt.s32.totalorder %s23, 0
        %s1403 = scalar_select %p1402, %s23, 0
        %s1404 = smul.addr %s1403, 8
        %s1405 = scalar_lea.vmem %s6, %s1404
      $region60: #{discriminator_forward.5} parent=43 // pred_fallthru
        _
    $region44: #{discriminator_forward.5} parent=5 // pred_fallthru
      _
    %p1406 = scmp.le.s32.totalorder 2, %s14
    // Predicated region
    $region61: #{discriminator_forward.5} parent=5 // pred_check
      %p1407 = pneg %p1406
    $region62: #{discriminator_forward.5} parent=5 // pred_check_branch
      %1409 = sbr.rel (%p1407) target = $region64
    $region63: #{discriminator_forward.5} parent=5 // pred_region
      %s1410 = ssub.s32 %s14, 2
    $region64: #{discriminator_forward.5} parent=5 // pred_fallthru
      _
  $region6: #{discriminator_forward.5} parent=0 // loop_footer
    %s18 = sadd.s32 1, %s14
  $region7: #{discriminator_forward.5} parent=0 // loop_footer_branch
    %13 = sbr.rel target = $region3
  $region8: #{discriminator_forward.5} parent=0 // loop_exit
    _

</llo_original>
